<compile_context>
chip_gen: v5e
topology: v5e:2x2
jax: 0.10.0
libtpu: 0.0.40
codegen_flags: <defaults>
</compile_context>

<pallas_src>
import functools

import numpy as np

import jax
import jax.numpy as jnp
from jax.experimental import pallas as pl
from jax.experimental.pallas import tpu as pltpu

REDUCTION = 16      # reduction_ratio (Channel & Spatial)
DILATION = 4        # dilation_val
BN_EPS = 1e-5

# tap offsets of the dilated 3x3 conv, k = ky*3 + kx  (shared by wrapper & kernel)
_TAP_OFFSETS = [((ky - 1) * DILATION, (kx - 1) * DILATION)
                for ky in range(3) for kx in range(3)]


# ---------------------------------------------------------------------------
# kernel
# ---------------------------------------------------------------------------
def _modulator_kernel(x_ref,                                   # (Bb, C, HW)  VMEM
                      mask_ref,                                # (9, HW) 0/1  VMEM
                      wc1, bc1, wc2, bc2,                      # channel MLP  VMEM
                      wr, br, wd0, bd0, wd1, bd1, wf, bf,      # spatial conv VMEM
                      o_ref,                                   # (Bb, C, HW)  VMEM
                      *, W):
    f32 = jnp.float32
    Bb, C, HW = x_ref.shape
    inv_hw = 1.0 / HW

    # ---- load the (tiny) weights once, hoisted out of the batch loop --------
    wc1v, bc1v = wc1[...], bc1[...]          # (Cr, C), (Cr, 1)
    wc2v, bc2v = wc2[...], bc2[...]          # (C, Cr), (C, 1)
    wrv, brv = wr[...], br[...]              # (Cr, C), (Cr, 1)
    wd0v, bd0v = wd0[...], bd0[...]          # (Cr, 9*Cr), (Cr, 1)
    wd1v, bd1v = wd1[...], bd1[...]
    wfv, bfv = wf[...], bf[...]              # (1, Cr), (1, 1)

    def dilated_conv(planes, wv, bv):
        # im2col over the 9 dilated taps: pltpu.roll on the flattened HW axis
        # (XLU slot) + precomputed 0/1 boundary mask, then one MXU dot.
        taps = []
        for k, (dy, dx) in enumerate(_TAP_OFFSETS):
            if dy == 0 and dx == 0:
                taps.append(planes)
            else:
                shift = (-(dy * W + dx)) % HW
                t = pltpu.roll(planes, shift=shift, axis=1)
                taps.append(t * mask_ref[k:k + 1, :])          # zero out-of-bounds taps
        tapmat = jnp.concatenate(taps, axis=0)                 # (9*Cr, HW)
        y = jnp.dot(wv, tapmat, preferred_element_type=f32) + bv
        return jnp.maximum(y, 0.0)

    for b in range(Bb):                       # tiny static batch loop (whole-slab math)
        xb = x_ref[b].astype(f32)             # (C, HW) lane-dense slab

        # ---- channel attention: avg-pool -> fc1(+BN) -> ReLU -> fc2 ---------
        pooled = jnp.sum(xb, axis=-1, keepdims=True) * inv_hw                   # (C, 1)
        h = jnp.maximum(jnp.dot(wc1v, pooled, preferred_element_type=f32) + bc1v,
                        0.0)                                                    # (Cr, 1)
        ch = jnp.dot(wc2v, h, preferred_element_type=f32) + bc2v                # (C, 1)

        # ---- spatial attention ----------------------------------------------
        red = jnp.maximum(jnp.dot(wrv, xb, preferred_element_type=f32) + brv,
                          0.0)                                                  # (Cr, HW)
        d = dilated_conv(red, wd0v, bd0v)
        d = dilated_conv(d, wd1v, bd1v)
        sp = jnp.dot(wfv, d, preferred_element_type=f32) + bfv                  # (1, HW)

        # ---- combine: out = sigmoid(ch * sp) * x -----------------------------
        z = ch * sp                                                             # (C, HW)
        att = pl.reciprocal(1.0 + jnp.exp(-z), approx=True)                     # sigmoid (EUP)
        o_ref[b] = (att * xb).astype(o_ref.dtype)                               # full-tile store


# ---------------------------------------------------------------------------
# Module-equivalent wrapper
# ---------------------------------------------------------------------------
class ModulatorPallas:
    """Pallas-TPU implementation of Modulator (eval-mode BatchNorm, folded)."""

    def __init__(self, gate_channel, key=None):
        C = gate_channel
        Cr = C // REDUCTION
        assert Cr >= 1, "gate_channel must be >= reduction_ratio"
        self.C, self.Cr = C, Cr

        key = jax.random.PRNGKey(0) if key is None else key
        keys = iter(jax.random.split(key, 32))

        def normal(shape, scale):
            return scale * jax.random.normal(next(keys), shape, jnp.float32)

        def bn_params(n):
            gamma = 1.0 + 0.2 * jax.random.normal(next(keys), (n,), jnp.float32)
            beta = 0.2 * jax.random.normal(next(keys), (n,), jnp.float32)
            mean = 0.1 * jax.random.normal(next(keys), (n,), jnp.float32)
            var = 0.5 + jax.random.uniform(next(keys), (n,), jnp.float32)
            return gamma, beta, mean, var

        # ---- raw parameters (torch layouts: Linear (out,in), Conv (O,I,kh,kw)) ----
        self.wc1 = normal((Cr, C), 0.3); self.bc1 = normal((Cr,), 0.1)   # gate_c_fc_0
        self.bn_c = bn_params(Cr)                                        # gate_c_bn_1
        self.wc2 = normal((C, Cr), 0.3); self.bc2 = normal((C,), 0.1)    # gate_c_fc_final
        self.wr = normal((Cr, C, 1, 1), 0.3); self.br = normal((Cr,), 0.1)
        self.bn_r = bn_params(Cr)
        self.wd0 = normal((Cr, Cr, 3, 3), 0.3); self.bd0 = normal((Cr,), 0.1)
        self.bn_d0 = bn_params(Cr)
        self.wd1 = normal((Cr, Cr, 3, 3), 0.3); self.bd1 = normal((Cr,), 0.1)
        self.bn_d1 = bn_params(Cr)
        self.wf = normal((1, Cr, 1, 1), 0.3); self.bf = normal((1,), 0.1)

        # ---- fold eval-mode BN into the preceding layer; pack ONCE into the -------
        # ---- lane-/MXU-friendly layouts used inside the kernel --------------------
        def fold(w, b, bn):
            gamma, beta, mean, var = bn
            s = gamma / jnp.sqrt(var + BN_EPS)
            w = w * s.reshape((-1,) + (1,) * (w.ndim - 1))
            b = s * (b - mean) + beta
            return w, b

        wc1_f, bc1_f = fold(self.wc1, self.bc1, self.bn_c)
        wr_f, br_f = fold(self.wr, self.br, self.bn_r)
        wd0_f, bd0_f = fold(self.wd0, self.bd0, self.bn_d0)
        wd1_f, bd1_f = fold(self.wd1, self.bd1, self.bn_d1)

        def im2col_w(w):            # (O, I, 3, 3) -> (O, 9*I), column index = k*I + i
            o, i = w.shape[0], w.shape[1]
            return w.reshape(o, i, 9).transpose(0, 2, 1).reshape(o, 9 * i)

        self.params = (
            wc1_f,                          # (Cr, C)
            bc1_f.reshape(Cr, 1),
            self.wc2,                       # (C, Cr)
            self.bc2.reshape(C, 1),
            wr_f.reshape(Cr, C),
            br_f.reshape(Cr, 1),
            im2col_w(wd0_f), bd0_f.reshape(Cr, 1),
            im2col_w(wd1_f), bd1_f.reshape(Cr, 1),
            self.wf.reshape(1, Cr),
            self.bf.reshape(1, 1),
        )

    @staticmethod
    def _tap_masks(H, W):
        """(9, H*W) 0/1 table zeroing out-of-bounds taps of the dilated 3x3 conv."""
        yy, xx = np.meshgrid(np.arange(H), np.arange(W), indexing="ij")
        rows = []
        for dy, dx in _TAP_OFFSETS:
            valid = (yy + dy >= 0) & (yy + dy < H) & (xx + dx >= 0) & (xx + dx < W)
            rows.append(valid.reshape(-1))
        return jnp.asarray(np.stack(rows).astype(np.float32))

    def __call__(self, x, batch_block=None):
        B, C, H, W = x.shape
        assert C == self.C and H == W   # avg_pool2d(kernel=H, stride=H) -> (1, 1)
        HW = H * W
        Bb = B if batch_block is None else batch_block   # e.g. B//2 on v7x (2 TCs)
        assert B % Bb == 0

        x2 = x.reshape(B, C, HW)                         # lane-dense (HW = 2x128 lanes)
        tap_mask = self._tap_masks(H, W)                 # (9, HW) boundary masks

        kernel = functools.partial(_modulator_kernel, W=W)

        def const_spec(a):
            return pl.BlockSpec(a.shape, lambda b, nd=a.ndim: (0,) * nd)

        out = pl.pallas_call(
            kernel,
            out_shape=jax.ShapeDtypeStruct((B, C, HW), x.dtype),
            grid=(B // Bb,),
            in_specs=[pl.BlockSpec((Bb, C, HW), lambda b: (b, 0, 0)),
                      const_spec(tap_mask)]
                     + [const_spec(p) for p in self.params],
            out_specs=pl.BlockSpec((Bb, C, HW), lambda b: (b, 0, 0)),
            compiler_params=pltpu.CompilerParams(
                dimension_semantics=("parallel",)),
        )(x2, tap_mask, *self.params)
        return out.reshape(B, C, H, W)

    # Pure-JAX reference (raw, un-folded params) for correctness checking.
    def reference(self, x):
        hp = jax.lax.Precision.HIGHEST

        def bn(y, bnp):
            gamma, beta, mean, var = bnp
            shp = [1] * y.ndim
            shp[1] = -1
            g, b, m, v = (t.reshape(shp) for t in (gamma, beta, mean, var))
            return (y - m) / jnp.sqrt(v + BN_EPS) * g + b

        def conv(y, w, b, dilation=1, padding=0):
            out = jax.lax.conv_general_dilated(
                y, w, window_strides=(1, 1),
                padding=[(padding, padding), (padding, padding)],
                rhs_dilation=(dilation, dilation),
                dimension_numbers=("NCHW", "OIHW", "NCHW"),
                precision=hp)
            return out + b.reshape(1, -1, 1, 1)

        # channel attention
        pooled = jnp.mean(x, axis=(2, 3))                       # (B, C)
        h = jnp.dot(pooled, self.wc1.T, precision=hp) + self.bc1
        h = jnp.maximum(bn(h, self.bn_c), 0.0)
        ch = jnp.dot(h, self.wc2.T, precision=hp) + self.bc2    # (B, C)
        # spatial attention
        y = jnp.maximum(bn(conv(x, self.wr, self.br), self.bn_r), 0.0)
        y = jnp.maximum(bn(conv(y, self.wd0, self.bd0, DILATION, DILATION), self.bn_d0), 0.0)
        y = jnp.maximum(bn(conv(y, self.wd1, self.bd1, DILATION, DILATION), self.bn_d1), 0.0)
        sp = conv(y, self.wf, self.bf)                          # (B, 1, H, W)
        att = jax.nn.sigmoid(ch[:, :, None, None] * sp)
        return att * x


if __name__ == "__main__":
    B, C, H, W = 2, 32, 16, 16        # gate_channel=32 -> reduced channels = 2

    key = jax.random.PRNGKey(0)
    kx, kp = jax.random.split(key)
    x = jax.random.normal(kx, (B, C, H, W), jnp.float32)

    mod = ModulatorPallas(gate_channel=C, key=kp)
    out = mod(x)
    jax.block_until_ready(out)

    assert out.shape == (B, C, H, W)
    assert bool(jnp.all(jnp.isfinite(out)))
    ref = mod.reference(x)
    max_err = float(jnp.max(jnp.abs(out - ref)))
    # Tolerance: approx-reciprocal sigmoid (EUP vrcp, ~2^-12 rel) times |x|_max plus
    # MXU-vs-XLA accumulation drift stays well under 5e-3 on these O(1) outputs.
    assert max_err < 5e-3, f"mismatch vs reference: max abs err = {max_err}"
    print("KERNEL_OK")
</pallas_src>

<mosaic_0001>
module attributes {stable_mosaic.version = 11 : i64} {
  func.func @_modulator_kernel(%arg0: i32, %arg1: memref<2x32x256xf32, #tpu.memory_space<vmem>>, %arg2: memref<9x256xf32, #tpu.memory_space<vmem>>, %arg3: memref<2x32xf32, #tpu.memory_space<vmem>>, %arg4: memref<2x1xf32, #tpu.memory_space<vmem>>, %arg5: memref<32x2xf32, #tpu.memory_space<vmem>>, %arg6: memref<32x1xf32, #tpu.memory_space<vmem>>, %arg7: memref<2x32xf32, #tpu.memory_space<vmem>>, %arg8: memref<2x1xf32, #tpu.memory_space<vmem>>, %arg9: memref<2x18xf32, #tpu.memory_space<vmem>>, %arg10: memref<2x1xf32, #tpu.memory_space<vmem>>, %arg11: memref<2x18xf32, #tpu.memory_space<vmem>>, %arg12: memref<2x1xf32, #tpu.memory_space<vmem>>, %arg13: memref<1x2xf32, #tpu.memory_space<vmem>>, %arg14: memref<1x1xf32, #tpu.memory_space<vmem>>, %arg15: memref<2x32x256xf32, #tpu.memory_space<vmem>>) attributes {dimension_semantics = [#tpu.dimension_semantics<parallel>], iteration_bounds = array<i64: 1>, scalar_prefetch = 0 : i64, scratch_operands = 0 : i64, tpu.core_type = #tpu.core_type<tc>, window_params = [{transform_indices = @transform_0, window_bounds = array<i64: 2, 32, 256>}, {pipeline_mode = #tpu.pipeline_mode<synchronous>, transform_indices = @transform_1, window_bounds = array<i64: 9, 256>}, {pipeline_mode = #tpu.pipeline_mode<synchronous>, transform_indices = @transform_2, window_bounds = array<i64: 2, 32>}, {pipeline_mode = #tpu.pipeline_mode<synchronous>, transform_indices = @transform_3, window_bounds = array<i64: 2, 1>}, {pipeline_mode = #tpu.pipeline_mode<synchronous>, transform_indices = @transform_4, window_bounds = array<i64: 32, 2>}, {pipeline_mode = #tpu.pipeline_mode<synchronous>, transform_indices = @transform_5, window_bounds = array<i64: 32, 1>}, {pipeline_mode = #tpu.pipeline_mode<synchronous>, transform_indices = @transform_6, window_bounds = array<i64: 2, 32>}, {pipeline_mode = #tpu.pipeline_mode<synchronous>, transform_indices = @transform_7, window_bounds = array<i64: 2, 1>}, {pipeline_mode = #tpu.pipeline_mode<synchronous>, transform_indices = @transform_8, window_bounds = array<i64: 2, 18>}, {pipeline_mode = #tpu.pipeline_mode<synchronous>, transform_indices = @transform_9, window_bounds = array<i64: 2, 1>}, {pipeline_mode = #tpu.pipeline_mode<synchronous>, transform_indices = @transform_10, window_bounds = array<i64: 2, 18>}, {pipeline_mode = #tpu.pipeline_mode<synchronous>, transform_indices = @transform_11, window_bounds = array<i64: 2, 1>}, {pipeline_mode = #tpu.pipeline_mode<synchronous>, transform_indices = @transform_12, window_bounds = array<i64: 1, 2>}, {pipeline_mode = #tpu.pipeline_mode<synchronous>, transform_indices = @transform_13, window_bounds = array<i64: 1, 1>}, {transform_indices = @transform_14, window_bounds = array<i64: 2, 32, 256>}]} {
    %c0 = arith.constant 0 : index
    %c0_0 = arith.constant 0 : index
    %0 = vector.load %arg3[%c0, %c0_0] : memref<2x32xf32, #tpu.memory_space<vmem>>, vector<2x32xf32>
    %c0_1 = arith.constant 0 : index
    %c0_2 = arith.constant 0 : index
    %1 = vector.load %arg4[%c0_1, %c0_2] : memref<2x1xf32, #tpu.memory_space<vmem>>, vector<2x1xf32>
    %c0_3 = arith.constant 0 : index
    %c0_4 = arith.constant 0 : index
    %2 = vector.load %arg5[%c0_3, %c0_4] : memref<32x2xf32, #tpu.memory_space<vmem>>, vector<32x2xf32>
    %c0_5 = arith.constant 0 : index
    %c0_6 = arith.constant 0 : index
    %3 = vector.load %arg6[%c0_5, %c0_6] : memref<32x1xf32, #tpu.memory_space<vmem>>, vector<32x1xf32>
    %c0_7 = arith.constant 0 : index
    %c0_8 = arith.constant 0 : index
    %4 = vector.load %arg7[%c0_7, %c0_8] : memref<2x32xf32, #tpu.memory_space<vmem>>, vector<2x32xf32>
    %c0_9 = arith.constant 0 : index
    %c0_10 = arith.constant 0 : index
    %5 = vector.load %arg8[%c0_9, %c0_10] : memref<2x1xf32, #tpu.memory_space<vmem>>, vector<2x1xf32>
    %c0_11 = arith.constant 0 : index
    %c0_12 = arith.constant 0 : index
    %6 = vector.load %arg9[%c0_11, %c0_12] : memref<2x18xf32, #tpu.memory_space<vmem>>, vector<2x18xf32>
    %c0_13 = arith.constant 0 : index
    %c0_14 = arith.constant 0 : index
    %7 = vector.load %arg10[%c0_13, %c0_14] : memref<2x1xf32, #tpu.memory_space<vmem>>, vector<2x1xf32>
    %c0_15 = arith.constant 0 : index
    %c0_16 = arith.constant 0 : index
    %8 = vector.load %arg11[%c0_15, %c0_16] : memref<2x18xf32, #tpu.memory_space<vmem>>, vector<2x18xf32>
    %c0_17 = arith.constant 0 : index
    %c0_18 = arith.constant 0 : index
    %9 = vector.load %arg12[%c0_17, %c0_18] : memref<2x1xf32, #tpu.memory_space<vmem>>, vector<2x1xf32>
    %c0_19 = arith.constant 0 : index
    %c0_20 = arith.constant 0 : index
    %10 = vector.load %arg13[%c0_19, %c0_20] : memref<1x2xf32, #tpu.memory_space<vmem>>, vector<1x2xf32>
    %c0_21 = arith.constant 0 : index
    %c0_22 = arith.constant 0 : index
    %11 = vector.load %arg14[%c0_21, %c0_22] : memref<1x1xf32, #tpu.memory_space<vmem>>, vector<1x1xf32>
    %c0_23 = arith.constant 0 : index
    %c0_24 = arith.constant 0 : index
    %c0_25 = arith.constant 0 : index
    %12 = vector.load %arg1[%c0_23, %c0_24, %c0_25] : memref<2x32x256xf32, #tpu.memory_space<vmem>>, vector<1x32x256xf32>
    %13 = vector.shape_cast %12 : vector<1x32x256xf32> to vector<32x256xf32>
    %cst = arith.constant dense<0.000000e+00> : vector<32xf32>
    %14 = vector.multi_reduction <add>, %13, %cst [1] : vector<32x256xf32> to vector<32xf32>
    %15 = vector.shape_cast %14 : vector<32xf32> to vector<32x1xf32>
    %cst_26 = arith.constant 3.906250e-03 : f32
    %16 = vector.broadcast %cst_26 : f32 to vector<32x1xf32>
    %17 = arith.mulf %15, %16 : vector<32x1xf32>
    %cst_27 = arith.constant dense<0.000000e+00> : vector<2x1xf32>
    %18 = tpu.matmul %0, %17, %cst_27 {dimension_numbers = #tpu.dot_dimension_numbers<[1], [0], [0], [1], [0, 0, 1, 1], [], []>} : vector<2x32xf32>, vector<32x1xf32>, vector<2x1xf32> -> vector<2x1xf32>
    %19 = arith.addf %18, %1 : vector<2x1xf32>
    %cst_28 = arith.constant 0.000000e+00 : f32
    %20 = vector.broadcast %cst_28 : f32 to vector<2x1xf32>
    %21 = arith.maximumf %19, %20 : vector<2x1xf32>
    %cst_29 = arith.constant dense<0.000000e+00> : vector<32x1xf32>
    %22 = tpu.matmul %2, %21, %cst_29 {dimension_numbers = #tpu.dot_dimension_numbers<[1], [0], [0], [1], [0, 0, 1, 1], [], []>} : vector<32x2xf32>, vector<2x1xf32>, vector<32x1xf32> -> vector<32x1xf32>
    %23 = arith.addf %22, %3 : vector<32x1xf32>
    %cst_30 = arith.constant dense<0.000000e+00> : vector<2x256xf32>
    %24 = tpu.matmul %4, %13, %cst_30 {dimension_numbers = #tpu.dot_dimension_numbers<[1], [0], [0], [1], [0, 0, 1, 1], [], []>} : vector<2x32xf32>, vector<32x256xf32>, vector<2x256xf32> -> vector<2x256xf32>
    %25 = vector.broadcast %5 : vector<2x1xf32> to vector<2x256xf32>
    %26 = arith.addf %24, %25 : vector<2x256xf32>
    %cst_31 = arith.constant 0.000000e+00 : f32
    %27 = vector.broadcast %cst_31 : f32 to vector<2x256xf32>
    %28 = arith.maximumf %26, %27 : vector<2x256xf32>
    %c68_i32 = arith.constant 68 : i32
    %29 = tpu.dynamic_rotate %28 by %c68_i32 dim 1 : vector<2x256xf32>, i32 -> vector<2x256xf32>
    %c0_32 = arith.constant 0 : index
    %c0_33 = arith.constant 0 : index
    %30 = vector.load %arg2[%c0_32, %c0_33] : memref<9x256xf32, #tpu.memory_space<vmem>>, vector<1x256xf32>
    %31 = vector.broadcast %30 : vector<1x256xf32> to vector<2x256xf32>
    %32 = arith.mulf %29, %31 : vector<2x256xf32>
    %c64_i32 = arith.constant 64 : i32
    %33 = tpu.dynamic_rotate %28 by %c64_i32 dim 1 : vector<2x256xf32>, i32 -> vector<2x256xf32>
    %c1 = arith.constant 1 : index
    %c0_34 = arith.constant 0 : index
    %34 = vector.load %arg2[%c1, %c0_34] : memref<9x256xf32, #tpu.memory_space<vmem>>, vector<1x256xf32>
    %35 = vector.broadcast %34 : vector<1x256xf32> to vector<2x256xf32>
    %36 = arith.mulf %33, %35 : vector<2x256xf32>
    %c60_i32 = arith.constant 60 : i32
    %37 = tpu.dynamic_rotate %28 by %c60_i32 dim 1 : vector<2x256xf32>, i32 -> vector<2x256xf32>
    %c2 = arith.constant 2 : index
    %c0_35 = arith.constant 0 : index
    %38 = vector.load %arg2[%c2, %c0_35] : memref<9x256xf32, #tpu.memory_space<vmem>>, vector<1x256xf32>
    %39 = vector.broadcast %38 : vector<1x256xf32> to vector<2x256xf32>
    %40 = arith.mulf %37, %39 : vector<2x256xf32>
    %c4_i32 = arith.constant 4 : i32
    %41 = tpu.dynamic_rotate %28 by %c4_i32 dim 1 : vector<2x256xf32>, i32 -> vector<2x256xf32>
    %c3 = arith.constant 3 : index
    %c0_36 = arith.constant 0 : index
    %42 = vector.load %arg2[%c3, %c0_36] : memref<9x256xf32, #tpu.memory_space<vmem>>, vector<1x256xf32>
    %43 = vector.broadcast %42 : vector<1x256xf32> to vector<2x256xf32>
    %44 = arith.mulf %41, %43 : vector<2x256xf32>
    %c252_i32 = arith.constant 252 : i32
    %45 = tpu.dynamic_rotate %28 by %c252_i32 dim 1 : vector<2x256xf32>, i32 -> vector<2x256xf32>
    %c5 = arith.constant 5 : index
    %c0_37 = arith.constant 0 : index
    %46 = vector.load %arg2[%c5, %c0_37] : memref<9x256xf32, #tpu.memory_space<vmem>>, vector<1x256xf32>
    %47 = vector.broadcast %46 : vector<1x256xf32> to vector<2x256xf32>
    %48 = arith.mulf %45, %47 : vector<2x256xf32>
    %c196_i32 = arith.constant 196 : i32
    %49 = tpu.dynamic_rotate %28 by %c196_i32 dim 1 : vector<2x256xf32>, i32 -> vector<2x256xf32>
    %c6 = arith.constant 6 : index
    %c0_38 = arith.constant 0 : index
    %50 = vector.load %arg2[%c6, %c0_38] : memref<9x256xf32, #tpu.memory_space<vmem>>, vector<1x256xf32>
    %51 = vector.broadcast %50 : vector<1x256xf32> to vector<2x256xf32>
    %52 = arith.mulf %49, %51 : vector<2x256xf32>
    %c192_i32 = arith.constant 192 : i32
    %53 = tpu.dynamic_rotate %28 by %c192_i32 dim 1 : vector<2x256xf32>, i32 -> vector<2x256xf32>
    %c7 = arith.constant 7 : index
    %c0_39 = arith.constant 0 : index
    %54 = vector.load %arg2[%c7, %c0_39] : memref<9x256xf32, #tpu.memory_space<vmem>>, vector<1x256xf32>
    %55 = vector.broadcast %54 : vector<1x256xf32> to vector<2x256xf32>
    %56 = arith.mulf %53, %55 : vector<2x256xf32>
    %c188_i32 = arith.constant 188 : i32
    %57 = tpu.dynamic_rotate %28 by %c188_i32 dim 1 : vector<2x256xf32>, i32 -> vector<2x256xf32>
    %c8 = arith.constant 8 : index
    %c0_40 = arith.constant 0 : index
    %58 = vector.load %arg2[%c8, %c0_40] : memref<9x256xf32, #tpu.memory_space<vmem>>, vector<1x256xf32>
    %59 = vector.broadcast %58 : vector<1x256xf32> to vector<2x256xf32>
    %60 = arith.mulf %57, %59 : vector<2x256xf32>
    %61 = tpu.concatenate %32, %36, %40, %44, %28, %48, %52, %56, %60 in 0 : vector<2x256xf32>, vector<2x256xf32>, vector<2x256xf32>, vector<2x256xf32>, vector<2x256xf32>, vector<2x256xf32>, vector<2x256xf32>, vector<2x256xf32>, vector<2x256xf32> -> vector<18x256xf32>
    %cst_41 = arith.constant dense<0.000000e+00> : vector<2x256xf32>
    %62 = tpu.matmul %6, %61, %cst_41 {dimension_numbers = #tpu.dot_dimension_numbers<[1], [0], [0], [1], [0, 0, 1, 1], [], []>} : vector<2x18xf32>, vector<18x256xf32>, vector<2x256xf32> -> vector<2x256xf32>
    %63 = vector.broadcast %7 : vector<2x1xf32> to vector<2x256xf32>
    %64 = arith.addf %62, %63 : vector<2x256xf32>
    %cst_42 = arith.constant 0.000000e+00 : f32
    %65 = vector.broadcast %cst_42 : f32 to vector<2x256xf32>
    %66 = arith.maximumf %64, %65 : vector<2x256xf32>
    %c68_i32_43 = arith.constant 68 : i32
    %67 = tpu.dynamic_rotate %66 by %c68_i32_43 dim 1 : vector<2x256xf32>, i32 -> vector<2x256xf32>
    %c0_44 = arith.constant 0 : index
    %c0_45 = arith.constant 0 : index
    %68 = vector.load %arg2[%c0_44, %c0_45] : memref<9x256xf32, #tpu.memory_space<vmem>>, vector<1x256xf32>
    %69 = vector.broadcast %68 : vector<1x256xf32> to vector<2x256xf32>
    %70 = arith.mulf %67, %69 : vector<2x256xf32>
    %c64_i32_46 = arith.constant 64 : i32
    %71 = tpu.dynamic_rotate %66 by %c64_i32_46 dim 1 : vector<2x256xf32>, i32 -> vector<2x256xf32>
    %c1_47 = arith.constant 1 : index
    %c0_48 = arith.constant 0 : index
    %72 = vector.load %arg2[%c1_47, %c0_48] : memref<9x256xf32, #tpu.memory_space<vmem>>, vector<1x256xf32>
    %73 = vector.broadcast %72 : vector<1x256xf32> to vector<2x256xf32>
    %74 = arith.mulf %71, %73 : vector<2x256xf32>
    %c60_i32_49 = arith.constant 60 : i32
    %75 = tpu.dynamic_rotate %66 by %c60_i32_49 dim 1 : vector<2x256xf32>, i32 -> vector<2x256xf32>
    %c2_50 = arith.constant 2 : index
    %c0_51 = arith.constant 0 : index
    %76 = vector.load %arg2[%c2_50, %c0_51] : memref<9x256xf32, #tpu.memory_space<vmem>>, vector<1x256xf32>
    %77 = vector.broadcast %76 : vector<1x256xf32> to vector<2x256xf32>
    %78 = arith.mulf %75, %77 : vector<2x256xf32>
    %c4_i32_52 = arith.constant 4 : i32
    %79 = tpu.dynamic_rotate %66 by %c4_i32_52 dim 1 : vector<2x256xf32>, i32 -> vector<2x256xf32>
    %c3_53 = arith.constant 3 : index
    %c0_54 = arith.constant 0 : index
    %80 = vector.load %arg2[%c3_53, %c0_54] : memref<9x256xf32, #tpu.memory_space<vmem>>, vector<1x256xf32>
    %81 = vector.broadcast %80 : vector<1x256xf32> to vector<2x256xf32>
    %82 = arith.mulf %79, %81 : vector<2x256xf32>
    %c252_i32_55 = arith.constant 252 : i32
    %83 = tpu.dynamic_rotate %66 by %c252_i32_55 dim 1 : vector<2x256xf32>, i32 -> vector<2x256xf32>
    %c5_56 = arith.constant 5 : index
    %c0_57 = arith.constant 0 : index
    %84 = vector.load %arg2[%c5_56, %c0_57] : memref<9x256xf32, #tpu.memory_space<vmem>>, vector<1x256xf32>
    %85 = vector.broadcast %84 : vector<1x256xf32> to vector<2x256xf32>
    %86 = arith.mulf %83, %85 : vector<2x256xf32>
    %c196_i32_58 = arith.constant 196 : i32
    %87 = tpu.dynamic_rotate %66 by %c196_i32_58 dim 1 : vector<2x256xf32>, i32 -> vector<2x256xf32>
    %c6_59 = arith.constant 6 : index
    %c0_60 = arith.constant 0 : index
    %88 = vector.load %arg2[%c6_59, %c0_60] : memref<9x256xf32, #tpu.memory_space<vmem>>, vector<1x256xf32>
    %89 = vector.broadcast %88 : vector<1x256xf32> to vector<2x256xf32>
    %90 = arith.mulf %87, %89 : vector<2x256xf32>
    %c192_i32_61 = arith.constant 192 : i32
    %91 = tpu.dynamic_rotate %66 by %c192_i32_61 dim 1 : vector<2x256xf32>, i32 -> vector<2x256xf32>
    %c7_62 = arith.constant 7 : index
    %c0_63 = arith.constant 0 : index
    %92 = vector.load %arg2[%c7_62, %c0_63] : memref<9x256xf32, #tpu.memory_space<vmem>>, vector<1x256xf32>
    %93 = vector.broadcast %92 : vector<1x256xf32> to vector<2x256xf32>
    %94 = arith.mulf %91, %93 : vector<2x256xf32>
    %c188_i32_64 = arith.constant 188 : i32
    %95 = tpu.dynamic_rotate %66 by %c188_i32_64 dim 1 : vector<2x256xf32>, i32 -> vector<2x256xf32>
    %c8_65 = arith.constant 8 : index
    %c0_66 = arith.constant 0 : index
    %96 = vector.load %arg2[%c8_65, %c0_66] : memref<9x256xf32, #tpu.memory_space<vmem>>, vector<1x256xf32>
    %97 = vector.broadcast %96 : vector<1x256xf32> to vector<2x256xf32>
    %98 = arith.mulf %95, %97 : vector<2x256xf32>
    %99 = tpu.concatenate %70, %74, %78, %82, %66, %86, %90, %94, %98 in 0 : vector<2x256xf32>, vector<2x256xf32>, vector<2x256xf32>, vector<2x256xf32>, vector<2x256xf32>, vector<2x256xf32>, vector<2x256xf32>, vector<2x256xf32>, vector<2x256xf32> -> vector<18x256xf32>
    %cst_67 = arith.constant dense<0.000000e+00> : vector<2x256xf32>
    %100 = tpu.matmul %8, %99, %cst_67 {dimension_numbers = #tpu.dot_dimension_numbers<[1], [0], [0], [1], [0, 0, 1, 1], [], []>} : vector<2x18xf32>, vector<18x256xf32>, vector<2x256xf32> -> vector<2x256xf32>
    %101 = vector.broadcast %9 : vector<2x1xf32> to vector<2x256xf32>
    %102 = arith.addf %100, %101 : vector<2x256xf32>
    %cst_68 = arith.constant 0.000000e+00 : f32
    %103 = vector.broadcast %cst_68 : f32 to vector<2x256xf32>
    %104 = arith.maximumf %102, %103 : vector<2x256xf32>
    %cst_69 = arith.constant dense<0.000000e+00> : vector<1x256xf32>
    %105 = tpu.matmul %10, %104, %cst_69 {dimension_numbers = #tpu.dot_dimension_numbers<[1], [0], [0], [1], [0, 0, 1, 1], [], []>} : vector<1x2xf32>, vector<2x256xf32>, vector<1x256xf32> -> vector<1x256xf32>
    %106 = vector.broadcast %11 : vector<1x1xf32> to vector<1x256xf32>
    %107 = arith.addf %105, %106 : vector<1x256xf32>
    %108 = vector.broadcast %23 : vector<32x1xf32> to vector<32x256xf32>
    %109 = vector.broadcast %107 : vector<1x256xf32> to vector<32x256xf32>
    %110 = arith.mulf %108, %109 : vector<32x256xf32>
    %cst_70 = arith.constant 0.000000e+00 : f32
    %111 = vector.broadcast %cst_70 : f32 to vector<32x256xf32>
    %112 = arith.subf %111, %110 : vector<32x256xf32>
    %113 = math.exp %112 : vector<32x256xf32>
    %cst_71 = arith.constant 1.000000e+00 : f32
    %114 = vector.broadcast %cst_71 : f32 to vector<32x256xf32>
    %115 = arith.addf %114, %113 : vector<32x256xf32>
    %116 = tpu.reciprocal %115 {approx = true} : vector<32x256xf32> -> vector<32x256xf32>
    %117 = arith.mulf %116, %13 : vector<32x256xf32>
    %c0_72 = arith.constant 0 : index
    %c0_73 = arith.constant 0 : index
    %c0_74 = arith.constant 0 : index
    %118 = vector.load %arg15[%c0_72, %c0_73, %c0_74] : memref<2x32x256xf32, #tpu.memory_space<vmem>>, vector<1x32x256xf32>
    %119 = vector.shape_cast %118 : vector<1x32x256xf32> to vector<32x256xf32>
    %120 = vector.shape_cast %117 : vector<32x256xf32> to vector<1x32x256xf32>
    tpu.vector_store %arg15[%c0_72, %c0_73, %c0_74], %120 {strides = array<i32>} : memref<2x32x256xf32, #tpu.memory_space<vmem>>, vector<1x32x256xf32>,
    %c1_75 = arith.constant 1 : index
    %c0_76 = arith.constant 0 : index
    %c0_77 = arith.constant 0 : index
    %121 = vector.load %arg1[%c1_75, %c0_76, %c0_77] : memref<2x32x256xf32, #tpu.memory_space<vmem>>, vector<1x32x256xf32>
    %122 = vector.shape_cast %121 : vector<1x32x256xf32> to vector<32x256xf32>
    %cst_78 = arith.constant dense<0.000000e+00> : vector<32xf32>
    %123 = vector.multi_reduction <add>, %122, %cst_78 [1] : vector<32x256xf32> to vector<32xf32>
    %124 = vector.shape_cast %123 : vector<32xf32> to vector<32x1xf32>
    %cst_79 = arith.constant 3.906250e-03 : f32
    %125 = vector.broadcast %cst_79 : f32 to vector<32x1xf32>
    %126 = arith.mulf %124, %125 : vector<32x1xf32>
    %cst_80 = arith.constant dense<0.000000e+00> : vector<2x1xf32>
    %127 = tpu.matmul %0, %126, %cst_80 {dimension_numbers = #tpu.dot_dimension_numbers<[1], [0], [0], [1], [0, 0, 1, 1], [], []>} : vector<2x32xf32>, vector<32x1xf32>, vector<2x1xf32> -> vector<2x1xf32>
    %128 = arith.addf %127, %1 : vector<2x1xf32>
    %cst_81 = arith.constant 0.000000e+00 : f32
    %129 = vector.broadcast %cst_81 : f32 to vector<2x1xf32>
    %130 = arith.maximumf %128, %129 : vector<2x1xf32>
    %cst_82 = arith.constant dense<0.000000e+00> : vector<32x1xf32>
    %131 = tpu.matmul %2, %130, %cst_82 {dimension_numbers = #tpu.dot_dimension_numbers<[1], [0], [0], [1], [0, 0, 1, 1], [], []>} : vector<32x2xf32>, vector<2x1xf32>, vector<32x1xf32> -> vector<32x1xf32>
    %132 = arith.addf %131, %3 : vector<32x1xf32>
    %cst_83 = arith.constant dense<0.000000e+00> : vector<2x256xf32>
    %133 = tpu.matmul %4, %122, %cst_83 {dimension_numbers = #tpu.dot_dimension_numbers<[1], [0], [0], [1], [0, 0, 1, 1], [], []>} : vector<2x32xf32>, vector<32x256xf32>, vector<2x256xf32> -> vector<2x256xf32>
    %134 = vector.broadcast %5 : vector<2x1xf32> to vector<2x256xf32>
    %135 = arith.addf %133, %134 : vector<2x256xf32>
    %cst_84 = arith.constant 0.000000e+00 : f32
    %136 = vector.broadcast %cst_84 : f32 to vector<2x256xf32>
    %137 = arith.maximumf %135, %136 : vector<2x256xf32>
    %c68_i32_85 = arith.constant 68 : i32
    %138 = tpu.dynamic_rotate %137 by %c68_i32_85 dim 1 : vector<2x256xf32>, i32 -> vector<2x256xf32>
    %c0_86 = arith.constant 0 : index
    %c0_87 = arith.constant 0 : index
    %139 = vector.load %arg2[%c0_86, %c0_87] : memref<9x256xf32, #tpu.memory_space<vmem>>, vector<1x256xf32>
    %140 = vector.broadcast %139 : vector<1x256xf32> to vector<2x256xf32>
    %141 = arith.mulf %138, %140 : vector<2x256xf32>
    %c64_i32_88 = arith.constant 64 : i32
    %142 = tpu.dynamic_rotate %137 by %c64_i32_88 dim 1 : vector<2x256xf32>, i32 -> vector<2x256xf32>
    %c1_89 = arith.constant 1 : index
    %c0_90 = arith.constant 0 : index
    %143 = vector.load %arg2[%c1_89, %c0_90] : memref<9x256xf32, #tpu.memory_space<vmem>>, vector<1x256xf32>
    %144 = vector.broadcast %143 : vector<1x256xf32> to vector<2x256xf32>
    %145 = arith.mulf %142, %144 : vector<2x256xf32>
    %c60_i32_91 = arith.constant 60 : i32
    %146 = tpu.dynamic_rotate %137 by %c60_i32_91 dim 1 : vector<2x256xf32>, i32 -> vector<2x256xf32>
    %c2_92 = arith.constant 2 : index
    %c0_93 = arith.constant 0 : index
    %147 = vector.load %arg2[%c2_92, %c0_93] : memref<9x256xf32, #tpu.memory_space<vmem>>, vector<1x256xf32>
    %148 = vector.broadcast %147 : vector<1x256xf32> to vector<2x256xf32>
    %149 = arith.mulf %146, %148 : vector<2x256xf32>
    %c4_i32_94 = arith.constant 4 : i32
    %150 = tpu.dynamic_rotate %137 by %c4_i32_94 dim 1 : vector<2x256xf32>, i32 -> vector<2x256xf32>
    %c3_95 = arith.constant 3 : index
    %c0_96 = arith.constant 0 : index
    %151 = vector.load %arg2[%c3_95, %c0_96] : memref<9x256xf32, #tpu.memory_space<vmem>>, vector<1x256xf32>
    %152 = vector.broadcast %151 : vector<1x256xf32> to vector<2x256xf32>
    %153 = arith.mulf %150, %152 : vector<2x256xf32>
    %c252_i32_97 = arith.constant 252 : i32
    %154 = tpu.dynamic_rotate %137 by %c252_i32_97 dim 1 : vector<2x256xf32>, i32 -> vector<2x256xf32>
    %c5_98 = arith.constant 5 : index
    %c0_99 = arith.constant 0 : index
    %155 = vector.load %arg2[%c5_98, %c0_99] : memref<9x256xf32, #tpu.memory_space<vmem>>, vector<1x256xf32>
    %156 = vector.broadcast %155 : vector<1x256xf32> to vector<2x256xf32>
    %157 = arith.mulf %154, %156 : vector<2x256xf32>
    %c196_i32_100 = arith.constant 196 : i32
    %158 = tpu.dynamic_rotate %137 by %c196_i32_100 dim 1 : vector<2x256xf32>, i32 -> vector<2x256xf32>
    %c6_101 = arith.constant 6 : index
    %c0_102 = arith.constant 0 : index
    %159 = vector.load %arg2[%c6_101, %c0_102] : memref<9x256xf32, #tpu.memory_space<vmem>>, vector<1x256xf32>
    %160 = vector.broadcast %159 : vector<1x256xf32> to vector<2x256xf32>
    %161 = arith.mulf %158, %160 : vector<2x256xf32>
    %c192_i32_103 = arith.constant 192 : i32
    %162 = tpu.dynamic_rotate %137 by %c192_i32_103 dim 1 : vector<2x256xf32>, i32 -> vector<2x256xf32>
    %c7_104 = arith.constant 7 : index
    %c0_105 = arith.constant 0 : index
    %163 = vector.load %arg2[%c7_104, %c0_105] : memref<9x256xf32, #tpu.memory_space<vmem>>, vector<1x256xf32>
    %164 = vector.broadcast %163 : vector<1x256xf32> to vector<2x256xf32>
    %165 = arith.mulf %162, %164 : vector<2x256xf32>
    %c188_i32_106 = arith.constant 188 : i32
    %166 = tpu.dynamic_rotate %137 by %c188_i32_106 dim 1 : vector<2x256xf32>, i32 -> vector<2x256xf32>
    %c8_107 = arith.constant 8 : index
    %c0_108 = arith.constant 0 : index
    %167 = vector.load %arg2[%c8_107, %c0_108] : memref<9x256xf32, #tpu.memory_space<vmem>>, vector<1x256xf32>
    %168 = vector.broadcast %167 : vector<1x256xf32> to vector<2x256xf32>
    %169 = arith.mulf %166, %168 : vector<2x256xf32>
    %170 = tpu.concatenate %141, %145, %149, %153, %137, %157, %161, %165, %169 in 0 : vector<2x256xf32>, vector<2x256xf32>, vector<2x256xf32>, vector<2x256xf32>, vector<2x256xf32>, vector<2x256xf32>, vector<2x256xf32>, vector<2x256xf32>, vector<2x256xf32> -> vector<18x256xf32>
    %cst_109 = arith.constant dense<0.000000e+00> : vector<2x256xf32>
    %171 = tpu.matmul %6, %170, %cst_109 {dimension_numbers = #tpu.dot_dimension_numbers<[1], [0], [0], [1], [0, 0, 1, 1], [], []>} : vector<2x18xf32>, vector<18x256xf32>, vector<2x256xf32> -> vector<2x256xf32>
    %172 = vector.broadcast %7 : vector<2x1xf32> to vector<2x256xf32>
    %173 = arith.addf %171, %172 : vector<2x256xf32>
    %cst_110 = arith.constant 0.000000e+00 : f32
    %174 = vector.broadcast %cst_110 : f32 to vector<2x256xf32>
    %175 = arith.maximumf %173, %174 : vector<2x256xf32>
    %c68_i32_111 = arith.constant 68 : i32
    %176 = tpu.dynamic_rotate %175 by %c68_i32_111 dim 1 : vector<2x256xf32>, i32 -> vector<2x256xf32>
    %c0_112 = arith.constant 0 : index
    %c0_113 = arith.constant 0 : index
    %177 = vector.load %arg2[%c0_112, %c0_113] : memref<9x256xf32, #tpu.memory_space<vmem>>, vector<1x256xf32>
    %178 = vector.broadcast %177 : vector<1x256xf32> to vector<2x256xf32>
    %179 = arith.mulf %176, %178 : vector<2x256xf32>
    %c64_i32_114 = arith.constant 64 : i32
    %180 = tpu.dynamic_rotate %175 by %c64_i32_114 dim 1 : vector<2x256xf32>, i32 -> vector<2x256xf32>
    %c1_115 = arith.constant 1 : index
    %c0_116 = arith.constant 0 : index
    %181 = vector.load %arg2[%c1_115, %c0_116] : memref<9x256xf32, #tpu.memory_space<vmem>>, vector<1x256xf32>
    %182 = vector.broadcast %181 : vector<1x256xf32> to vector<2x256xf32>
    %183 = arith.mulf %180, %182 : vector<2x256xf32>
    %c60_i32_117 = arith.constant 60 : i32
    %184 = tpu.dynamic_rotate %175 by %c60_i32_117 dim 1 : vector<2x256xf32>, i32 -> vector<2x256xf32>
    %c2_118 = arith.constant 2 : index
    %c0_119 = arith.constant 0 : index
    %185 = vector.load %arg2[%c2_118, %c0_119] : memref<9x256xf32, #tpu.memory_space<vmem>>, vector<1x256xf32>
    %186 = vector.broadcast %185 : vector<1x256xf32> to vector<2x256xf32>
    %187 = arith.mulf %184, %186 : vector<2x256xf32>
    %c4_i32_120 = arith.constant 4 : i32
    %188 = tpu.dynamic_rotate %175 by %c4_i32_120 dim 1 : vector<2x256xf32>, i32 -> vector<2x256xf32>
    %c3_121 = arith.constant 3 : index
    %c0_122 = arith.constant 0 : index
    %189 = vector.load %arg2[%c3_121, %c0_122] : memref<9x256xf32, #tpu.memory_space<vmem>>, vector<1x256xf32>
    %190 = vector.broadcast %189 : vector<1x256xf32> to vector<2x256xf32>
    %191 = arith.mulf %188, %190 : vector<2x256xf32>
    %c252_i32_123 = arith.constant 252 : i32
    %192 = tpu.dynamic_rotate %175 by %c252_i32_123 dim 1 : vector<2x256xf32>, i32 -> vector<2x256xf32>
    %c5_124 = arith.constant 5 : index
    %c0_125 = arith.constant 0 : index
    %193 = vector.load %arg2[%c5_124, %c0_125] : memref<9x256xf32, #tpu.memory_space<vmem>>, vector<1x256xf32>
    %194 = vector.broadcast %193 : vector<1x256xf32> to vector<2x256xf32>
    %195 = arith.mulf %192, %194 : vector<2x256xf32>
    %c196_i32_126 = arith.constant 196 : i32
    %196 = tpu.dynamic_rotate %175 by %c196_i32_126 dim 1 : vector<2x256xf32>, i32 -> vector<2x256xf32>
    %c6_127 = arith.constant 6 : index
    %c0_128 = arith.constant 0 : index
    %197 = vector.load %arg2[%c6_127, %c0_128] : memref<9x256xf32, #tpu.memory_space<vmem>>, vector<1x256xf32>
    %198 = vector.broadcast %197 : vector<1x256xf32> to vector<2x256xf32>
    %199 = arith.mulf %196, %198 : vector<2x256xf32>
    %c192_i32_129 = arith.constant 192 : i32
    %200 = tpu.dynamic_rotate %175 by %c192_i32_129 dim 1 : vector<2x256xf32>, i32 -> vector<2x256xf32>
    %c7_130 = arith.constant 7 : index
    %c0_131 = arith.constant 0 : index
    %201 = vector.load %arg2[%c7_130, %c0_131] : memref<9x256xf32, #tpu.memory_space<vmem>>, vector<1x256xf32>
    %202 = vector.broadcast %201 : vector<1x256xf32> to vector<2x256xf32>
    %203 = arith.mulf %200, %202 : vector<2x256xf32>
    %c188_i32_132 = arith.constant 188 : i32
    %204 = tpu.dynamic_rotate %175 by %c188_i32_132 dim 1 : vector<2x256xf32>, i32 -> vector<2x256xf32>
    %c8_133 = arith.constant 8 : index
    %c0_134 = arith.constant 0 : index
    %205 = vector.load %arg2[%c8_133, %c0_134] : memref<9x256xf32, #tpu.memory_space<vmem>>, vector<1x256xf32>
    %206 = vector.broadcast %205 : vector<1x256xf32> to vector<2x256xf32>
    %207 = arith.mulf %204, %206 : vector<2x256xf32>
    %208 = tpu.concatenate %179, %183, %187, %191, %175, %195, %199, %203, %207 in 0 : vector<2x256xf32>, vector<2x256xf32>, vector<2x256xf32>, vector<2x256xf32>, vector<2x256xf32>, vector<2x256xf32>, vector<2x256xf32>, vector<2x256xf32>, vector<2x256xf32> -> vector<18x256xf32>
    %cst_135 = arith.constant dense<0.000000e+00> : vector<2x256xf32>
    %209 = tpu.matmul %8, %208, %cst_135 {dimension_numbers = #tpu.dot_dimension_numbers<[1], [0], [0], [1], [0, 0, 1, 1], [], []>} : vector<2x18xf32>, vector<18x256xf32>, vector<2x256xf32> -> vector<2x256xf32>
    %210 = vector.broadcast %9 : vector<2x1xf32> to vector<2x256xf32>
    %211 = arith.addf %209, %210 : vector<2x256xf32>
    %cst_136 = arith.constant 0.000000e+00 : f32
    %212 = vector.broadcast %cst_136 : f32 to vector<2x256xf32>
    %213 = arith.maximumf %211, %212 : vector<2x256xf32>
    %cst_137 = arith.constant dense<0.000000e+00> : vector<1x256xf32>
    %214 = tpu.matmul %10, %213, %cst_137 {dimension_numbers = #tpu.dot_dimension_numbers<[1], [0], [0], [1], [0, 0, 1, 1], [], []>} : vector<1x2xf32>, vector<2x256xf32>, vector<1x256xf32> -> vector<1x256xf32>
    %215 = vector.broadcast %11 : vector<1x1xf32> to vector<1x256xf32>
    %216 = arith.addf %214, %215 : vector<1x256xf32>
    %217 = vector.broadcast %132 : vector<32x1xf32> to vector<32x256xf32>
    %218 = vector.broadcast %216 : vector<1x256xf32> to vector<32x256xf32>
    %219 = arith.mulf %217, %218 : vector<32x256xf32>
    %cst_138 = arith.constant 0.000000e+00 : f32
    %220 = vector.broadcast %cst_138 : f32 to vector<32x256xf32>
    %221 = arith.subf %220, %219 : vector<32x256xf32>
    %222 = math.exp %221 : vector<32x256xf32>
    %cst_139 = arith.constant 1.000000e+00 : f32
    %223 = vector.broadcast %cst_139 : f32 to vector<32x256xf32>
    %224 = arith.addf %223, %222 : vector<32x256xf32>
    %225 = tpu.reciprocal %224 {approx = true} : vector<32x256xf32> -> vector<32x256xf32>
    %226 = arith.mulf %225, %122 : vector<32x256xf32>
    %c1_140 = arith.constant 1 : index
    %c0_141 = arith.constant 0 : index
    %c0_142 = arith.constant 0 : index
    %227 = vector.load %arg15[%c1_140, %c0_141, %c0_142] : memref<2x32x256xf32, #tpu.memory_space<vmem>>, vector<1x32x256xf32>
    %228 = vector.shape_cast %227 : vector<1x32x256xf32> to vector<32x256xf32>
    %229 = vector.shape_cast %226 : vector<32x256xf32> to vector<1x32x256xf32>
    tpu.vector_store %arg15[%c1_140, %c0_141, %c0_142], %229 {strides = array<i32>} : memref<2x32x256xf32, #tpu.memory_space<vmem>>, vector<1x32x256xf32>,
    return
  }
  func.func @transform_0(%arg0: i32) -> (i32, i32, i32) {
    %c0_i32 = arith.constant 0 : i32
    %c0_i32_0 = arith.constant 0 : i32
    %c0_i32_1 = arith.constant 0 : i32
    return %arg0, %c0_i32, %c0_i32_0 : i32, i32, i32
  }
  func.func @transform_1(%arg0: i32) -> (i32, i32) {
    %c0_i32 = arith.constant 0 : i32
    %c0_i32_0 = arith.constant 0 : i32
    %c0_i32_1 = arith.constant 0 : i32
    return %c0_i32, %c0_i32_0 : i32, i32
  }
  func.func @transform_2(%arg0: i32) -> (i32, i32) {
    %c0_i32 = arith.constant 0 : i32
    %c0_i32_0 = arith.constant 0 : i32
    %c0_i32_1 = arith.constant 0 : i32
    return %c0_i32, %c0_i32_0 : i32, i32
  }
  func.func @transform_3(%arg0: i32) -> (i32, i32) {
    %c0_i32 = arith.constant 0 : i32
    %c0_i32_0 = arith.constant 0 : i32
    %c0_i32_1 = arith.constant 0 : i32
    return %c0_i32, %c0_i32_0 : i32, i32
  }
  func.func @transform_4(%arg0: i32) -> (i32, i32) {
    %c0_i32 = arith.constant 0 : i32
    %c0_i32_0 = arith.constant 0 : i32
    %c0_i32_1 = arith.constant 0 : i32
    return %c0_i32, %c0_i32_0 : i32, i32
  }
  func.func @transform_5(%arg0: i32) -> (i32, i32) {
    %c0_i32 = arith.constant 0 : i32
    %c0_i32_0 = arith.constant 0 : i32
    %c0_i32_1 = arith.constant 0 : i32
    return %c0_i32, %c0_i32_0 : i32, i32
  }
  func.func @transform_6(%arg0: i32) -> (i32, i32) {
    %c0_i32 = arith.constant 0 : i32
    %c0_i32_0 = arith.constant 0 : i32
    %c0_i32_1 = arith.constant 0 : i32
    return %c0_i32, %c0_i32_0 : i32, i32
  }
  func.func @transform_7(%arg0: i32) -> (i32, i32) {
    %c0_i32 = arith.constant 0 : i32
    %c0_i32_0 = arith.constant 0 : i32
    %c0_i32_1 = arith.constant 0 : i32
    return %c0_i32, %c0_i32_0 : i32, i32
  }
  func.func @transform_8(%arg0: i32) -> (i32, i32) {
    %c0_i32 = arith.constant 0 : i32
    %c0_i32_0 = arith.constant 0 : i32
    %c0_i32_1 = arith.constant 0 : i32
    return %c0_i32, %c0_i32_0 : i32, i32
  }
  func.func @transform_9(%arg0: i32) -> (i32, i32) {
    %c0_i32 = arith.constant 0 : i32
    %c0_i32_0 = arith.constant 0 : i32
    %c0_i32_1 = arith.constant 0 : i32
    return %c0_i32, %c0_i32_0 : i32, i32
  }
  func.func @transform_10(%arg0: i32) -> (i32, i32) {
    %c0_i32 = arith.constant 0 : i32
    %c0_i32_0 = arith.constant 0 : i32
    %c0_i32_1 = arith.constant 0 : i32
    return %c0_i32, %c0_i32_0 : i32, i32
  }
  func.func @transform_11(%arg0: i32) -> (i32, i32) {
    %c0_i32 = arith.constant 0 : i32
    %c0_i32_0 = arith.constant 0 : i32
    %c0_i32_1 = arith.constant 0 : i32
    return %c0_i32, %c0_i32_0 : i32, i32
  }
  func.func @transform_12(%arg0: i32) -> (i32, i32) {
    %c0_i32 = arith.constant 0 : i32
    %c0_i32_0 = arith.constant 0 : i32
    %c0_i32_1 = arith.constant 0 : i32
    return %c0_i32, %c0_i32_0 : i32, i32
  }
  func.func @transform_13(%arg0: i32) -> (i32, i32) {
    %c0_i32 = arith.constant 0 : i32
    %c0_i32_0 = arith.constant 0 : i32
    %c0_i32_1 = arith.constant 0 : i32
    return %c0_i32, %c0_i32_0 : i32, i32
  }
  func.func @transform_14(%arg0: i32) -> (i32, i32, i32) {
    %c0_i32 = arith.constant 0 : i32
    %c0_i32_0 = arith.constant 0 : i32
    %c0_i32_1 = arith.constant 0 : i32
    return %arg0, %c0_i32, %c0_i32_0 : i32, i32, i32
  }
}

</mosaic_0001>

<llo_original>
// kernel: tpu_custom_call.1
$region0: #{tpu_custom_call.1}
  #allocation0 [shape = 'u32[]', space=smem, size = 0x4, offset = 0x4, fixed_abs, tag = 'smem constant byte address 0x4 - core index']
  #allocation1 [shape = 'u32[72,128]{1,0:T(1,128)}', space=vmem, size = 0x9000, scoped, tag = 'internal scratch']
  #allocation2 [shape = 'f32[1,1]{1,0:T(1,128)S(1)}', space=vmem, size = 0x200, scoped, tag = 'scoped memory for tpu_custom_call.1']
  %s0 = inlined_call_operand.hbm [shape: f32[2,32,256], index: 0, kind: input, shape index: {}]
  %s1 = inlined_call_operand.vmem [shape: f32[9,256], index: 1, kind: input, shape index: {}]
  %s2 = inlined_call_operand.vmem [shape: f32[2,32], index: 2, kind: input, shape index: {}]
  %s3 = inlined_call_operand.vmem [shape: f32[2,1], index: 3, kind: input, shape index: {}]
  %s4 = inlined_call_operand.vmem [shape: f32[32,2], index: 4, kind: input, shape index: {}]
  %s5 = inlined_call_operand.vmem [shape: f32[32,1], index: 5, kind: input, shape index: {}]
  %s6 = inlined_call_operand.vmem [shape: f32[2,32], index: 6, kind: input, shape index: {}]
  %s7 = inlined_call_operand.vmem [shape: f32[2,1], index: 7, kind: input, shape index: {}]
  %s8 = inlined_call_operand.vmem [shape: f32[2,18], index: 8, kind: input, shape index: {}]
  %s9 = inlined_call_operand.vmem [shape: f32[2,1], index: 9, kind: input, shape index: {}]
  %s10 = inlined_call_operand.vmem [shape: f32[2,18], index: 10, kind: input, shape index: {}]
  %s11 = inlined_call_operand.vmem [shape: f32[2,1], index: 11, kind: input, shape index: {}]
  %s12 = inlined_call_operand.vmem [shape: f32[1,2], index: 12, kind: input, shape index: {}]
  %s13 = inlined_call_operand.<no memory space> [shape: f32[1,1], index: 13, kind: input, shape index: {}]
  %s14 = inlined_call_operand.hbm [shape: f32[2,32,256], index: 14, kind: output, shape index: {}]
  %s15 = sld [smem:[#allocation0]]
  $region70: #{tpu_custom_call.1} parent=0
    _
  %s17 = ssub.s32 1, %s15
  %s18 = scalar_select 0, %s17, %s15
  %v19 = vstv %s13
  %20 = vst [vmem:[#allocation2] sm:$0x1] %v19
  $region1: #{tpu_custom_call.1} parent=0
    #allocation3 [shape = 'u8[65536]{0}', space=vmem, size = 0x10000, scoped, tag = 'input window, operand 0, single buffered']
    #allocation4 [shape = 's32[1]{0}', space=sflag, size = 0x4, scoped, tag = 'scoped memory for tpu_custom_call.1']
    #allocation5 [shape = 's32[1]{0}', space=sflag, size = 0x4, scoped, tag = 'scoped memory for tpu_custom_call.1']
    #allocation6 [shape = 'u8[65536]{0}', space=vmem, size = 0x10000, scoped, tag = 'output window, operand 0, single buffered']
    %21 = vsyncpa [#allocation4], 0
    %22 = vsyncpa [#allocation5], 0
    // Predicated region
    $region2: #{tpu_custom_call.1} parent=1 // pred_check
      _
    $region3: #{tpu_custom_call.1} parent=1 // pred_check_branch
      %24 = sbr.rel (0) target = $region5
    $region4: #{tpu_custom_call.1} parent=1 // pred_region
      %26 = vsyncadd [#allocation4], 0
      %s27 = sshll.u32 %s0, 4
      %s28 = int_to_ptr.hbm [resolvable:$true] %s27
      %s29 = sshll.u32 [#allocation3], 4
      %s30 = int_to_ptr.vmem [resolvable:$true] %s29
      %35 = dma.hbm_to_vmem [thread:$0]  %s28, 2048, %s30, [#allocation4], 256, 256, 16
    $region5: #{tpu_custom_call.1} parent=1 // pred_fallthru
      _
    // Predicated region
    $region6: #{tpu_custom_call.1} parent=1 // pred_check
      _
    $region7: #{tpu_custom_call.1} parent=1 // pred_check_branch
      %37 = sbr.rel (0) target = $region9
    $region8: #{tpu_custom_call.1} parent=1 // pred_region
      _
    $region9: #{tpu_custom_call.1} parent=1 // pred_fallthru
      _
    // Predicated region
    $region10: #{tpu_custom_call.1} parent=1 // pred_check
      _
    $region11: #{tpu_custom_call.1} parent=1 // pred_check_branch
      %39 = sbr.rel (0) target = $region13
    $region12: #{tpu_custom_call.1} parent=1 // pred_region
      _
    $region13: #{tpu_custom_call.1} parent=1 // pred_fallthru
      _
    // Predicated region
    $region14: #{tpu_custom_call.1} parent=1 // pred_check
      _
    $region15: #{tpu_custom_call.1} parent=1 // pred_check_branch
      %41 = sbr.rel (0) target = $region17
    $region16: #{tpu_custom_call.1} parent=1 // pred_region
      _
    $region17: #{tpu_custom_call.1} parent=1 // pred_fallthru
      _
    // Predicated region
    $region18: #{tpu_custom_call.1} parent=1 // pred_check
      _
    $region19: #{tpu_custom_call.1} parent=1 // pred_check_branch
      %43 = sbr.rel (0) target = $region21
    $region20: #{tpu_custom_call.1} parent=1 // pred_region
      _
    $region21: #{tpu_custom_call.1} parent=1 // pred_fallthru
      _
    // Predicated region
    $region22: #{tpu_custom_call.1} parent=1 // pred_check
      _
    $region23: #{tpu_custom_call.1} parent=1 // pred_check_branch
      %45 = sbr.rel (0) target = $region25
    $region24: #{tpu_custom_call.1} parent=1 // pred_region
      _
    $region25: #{tpu_custom_call.1} parent=1 // pred_fallthru
      _
    // Predicated region
    $region26: #{tpu_custom_call.1} parent=1 // pred_check
      _
    $region27: #{tpu_custom_call.1} parent=1 // pred_check_branch
      %47 = sbr.rel (0) target = $region29
    $region28: #{tpu_custom_call.1} parent=1 // pred_region
      _
    $region29: #{tpu_custom_call.1} parent=1 // pred_fallthru
      _
    // Predicated region
    $region30: #{tpu_custom_call.1} parent=1 // pred_check
      _
    $region31: #{tpu_custom_call.1} parent=1 // pred_check_branch
      %49 = sbr.rel (0) target = $region33
    $region32: #{tpu_custom_call.1} parent=1 // pred_region
      _
    $region33: #{tpu_custom_call.1} parent=1 // pred_fallthru
      _
    // Predicated region
    $region34: #{tpu_custom_call.1} parent=1 // pred_check
      _
    $region35: #{tpu_custom_call.1} parent=1 // pred_check_branch
      %51 = sbr.rel (0) target = $region37
    $region36: #{tpu_custom_call.1} parent=1 // pred_region
      _
    $region37: #{tpu_custom_call.1} parent=1 // pred_fallthru
      _
    // Predicated region
    $region38: #{tpu_custom_call.1} parent=1 // pred_check
      _
    $region39: #{tpu_custom_call.1} parent=1 // pred_check_branch
      %53 = sbr.rel (0) target = $region41
    $region40: #{tpu_custom_call.1} parent=1 // pred_region
      _
    $region41: #{tpu_custom_call.1} parent=1 // pred_fallthru
      _
    // Predicated region
    $region42: #{tpu_custom_call.1} parent=1 // pred_check
      _
    $region43: #{tpu_custom_call.1} parent=1 // pred_check_branch
      %55 = sbr.rel (0) target = $region45
    $region44: #{tpu_custom_call.1} parent=1 // pred_region
      _
    $region45: #{tpu_custom_call.1} parent=1 // pred_fallthru
      _
    // Predicated region
    $region46: #{tpu_custom_call.1} parent=1 // pred_check
      _
    $region47: #{tpu_custom_call.1} parent=1 // pred_check_branch
      %57 = sbr.rel (0) target = $region49
    $region48: #{tpu_custom_call.1} parent=1 // pred_region
      _
    $region49: #{tpu_custom_call.1} parent=1 // pred_fallthru
      _
    // Predicated region
    $region50: #{tpu_custom_call.1} parent=1 // pred_check
      _
    $region51: #{tpu_custom_call.1} parent=1 // pred_check_branch
      %59 = sbr.rel (0) target = $region53
    $region52: #{tpu_custom_call.1} parent=1 // pred_region
      _
    $region53: #{tpu_custom_call.1} parent=1 // pred_fallthru
      _
    // Predicated region
    $region54: #{tpu_custom_call.1} parent=1 // pred_check
      _
    $region55: #{tpu_custom_call.1} parent=1 // pred_check_branch
      %61 = sbr.rel (0) target = $region57
    $region56: #{tpu_custom_call.1} parent=1 // pred_region
      _
    $region57: #{tpu_custom_call.1} parent=1 // pred_fallthru
      _
    // Predicated region
    $region58: #{tpu_custom_call.1} parent=1 // pred_check
      _
    $region59: #{tpu_custom_call.1} parent=1 // pred_check_branch
      %63 = sbr.rel (0) target = $region61
    $region60: #{tpu_custom_call.1} parent=1 // pred_region
      %65 = dma.done [#allocation4], 2048
    $region61: #{tpu_custom_call.1} parent=1 // pred_fallthru
      _
    %v66 = vld [vmem:[%s2] sm:$0x3]
    %v67 = vld [vmem:[%s3] sm:$0x3]
    %v68 = vld [vmem:[%s4] sm:$0xff]
    %v69 = vld [vmem:[%s4 + $0x8] sm:$0xff]
    %v70 = vld [vmem:[%s4 + $0x10] sm:$0xff]
    %v71 = vld [vmem:[%s4 + $0x18] sm:$0xff]
    %v72 = vld [vmem:[%s5] sm:$0xff]
    %v73 = vld [vmem:[%s5 + $0x8] sm:$0xff]
    %v74 = vld [vmem:[%s5 + $0x10] sm:$0xff]
    %v75 = vld [vmem:[%s5 + $0x18] sm:$0xff]
    %v76 = vld [vmem:[%s6] sm:$0x3]
    %v77 = vld [vmem:[%s7] sm:$0x3]
    %v78 = vld [vmem:[%s8] sm:$0x3]
    %v79 = vld [vmem:[%s9] sm:$0x3]
    %v80 = vld [vmem:[%s10] sm:$0x3]
    %v81 = vld [vmem:[%s11] sm:$0x3]
    %v82 = vld [vmem:[%s12] sm:$0x1]
    %v83 = vld [vmem:[#allocation2] sm:$0x1]
    %v84 = vld [vmem:[#allocation3] sm:$0xff]
    %v85 = vld [vmem:[#allocation3 + $0x8] sm:$0xff]
    %v86 = vld [vmem:[#allocation3 + $0x10] sm:$0xff]
    %v87 = vld [vmem:[#allocation3 + $0x18] sm:$0xff]
    %v88 = vld [vmem:[#allocation3 + $0x20] sm:$0xff]
    %v89 = vld [vmem:[#allocation3 + $0x28] sm:$0xff]
    %v90 = vld [vmem:[#allocation3 + $0x30] sm:$0xff]
    %v91 = vld [vmem:[#allocation3 + $0x38] sm:$0xff]
    %v92 = vadd.f32 %v84, %v85
    %93 = vadd.xlane.f32.xlu0 %v92
    %v94 = vpop.xlane.xlu0 %93
    %v95 = vadd.f32 %v86, %v87
    %96 = vadd.xlane.f32.xlu0 %v95
    %v97 = vpop.xlane.xlu0 %96
    %v98 = vadd.f32 %v88, %v89
    %99 = vadd.xlane.f32.xlu0 %v98
    %v100 = vpop.xlane.xlu0 %99
    %v101 = vadd.f32 %v90, %v91
    %102 = vadd.xlane.f32.xlu0 %v101
    %v103 = vpop.xlane.xlu0 %102
    %v104 = vmul.f32 %v94, 0.00390625
    %v105 = vmul.f32 %v97, 0.00390625
    %v106 = vmul.f32 %v100, 0.00390625
    %v107 = vmul.f32 %v103, 0.00390625
    %vm108 = vcmask 261120
    %v110 = vsel %vm108, %v66, 0
    %112 = vmatpush.msra.mxu0 0.0
    %113 = vmatpush.msra.mxu0 0.0
    %114 = vmatpush.msra.mxu0 0.0
    %115 = vmatpush.msra.mxu0 0.0
    %116 = vmatpush.msra.mxu0 0.0
    %117 = vmatpush.msra.mxu0 0.0
    %118 = vmatpush.msra.mxu0 0.0
    %119 = vmatpush.msra.mxu0 0.0
    %120 = vmatpush.msra.mxu0 0.0
    %121 = vmatpush.msra.mxu0 0.0
    %122 = vmatpush.msra.mxu0 0.0
    %123 = vmatpush.msra.mxu0 0.0
    %124 = vmatpush.msra.mxu0 %v107
    %125 = vmatpush.msra.mxu0 %v106
    %126 = vmatpush.msra.mxu0 %v105
    %127 = vmatpush.msra.mxu0 %v104
    %128 = vmatmul.f32.gmra.mxu0 %v110
    %v129 = vpop.f32.mrf.mxu0
    %v130 = vadd.f32 %v67, %v129
    %131 = vdwg.mxu0
    %v132 = vmax.f32 %v130, 0.0
    %vm133 = vcmask 15360
    %v135 = vsel %vm133, %v68, 0
    %v138 = vsel %vm133, %v69, 0
    %v141 = vsel %vm133, %v70, 0
    %v144 = vsel %vm133, %v71, 0
    %vm146 = vcmask 1041408
    %v148 = vsel %vm146, %v132, 0
    %150 = vmatpush.msra.mxu0 0.0
    %151 = vmatpush.msra.mxu0 0.0
    %152 = vmatpush.msra.mxu0 0.0
    %153 = vmatpush.msra.mxu0 0.0
    %154 = vmatpush.msra.mxu0 0.0
    %155 = vmatpush.msra.mxu0 0.0
    %156 = vmatpush.msra.mxu0 0.0
    %157 = vmatpush.msra.mxu0 0.0
    %158 = vmatpush.msra.mxu0 0.0
    %159 = vmatpush.msra.mxu0 0.0
    %160 = vmatpush.msra.mxu0 0.0
    %161 = vmatpush.msra.mxu0 0.0
    %162 = vmatpush.msra.mxu0 0.0
    %163 = vmatpush.msra.mxu0 0.0
    %164 = vmatpush.msra.mxu0 0.0
    %165 = vmatpush.msra.mxu0 %v148
    %166 = vmatmul.f32.gmra.mxu0 %v135
    %v167 = vpop.f32.mrf.mxu0
    %v168 = vadd.f32 %v72, %v167
    %169 = vmatmul.f32.gmra.mxu0 %v138
    %v170 = vpop.f32.mrf.mxu0
    %v171 = vadd.f32 %v73, %v170
    %172 = vmatmul.f32.gmra.mxu0 %v141
    %v173 = vpop.f32.mrf.mxu0
    %v174 = vadd.f32 %v74, %v173
    %175 = vmatmul.f32.gmra.mxu0 %v144
    %v176 = vpop.f32.mrf.mxu0
    %v177 = vadd.f32 %v75, %v176
    %178 = vdwg.mxu0
    %180 = vset.pattern.permute.xlu0 0
    %181 = vperm.xlu0 %180, %v77
    %v182 = vpop.permute.xlu0 %181
    %v185 = vsel %vm108, %v76, 0
    %187 = vmatpush.msra.mxu0 0.0
    %188 = vmatpush.msra.mxu0 0.0
    %189 = vmatpush.msra.mxu0 0.0
    %190 = vmatpush.msra.mxu0 0.0
    %191 = vmatpush.msra.mxu0 0.0
    %192 = vmatpush.msra.mxu0 0.0
    %193 = vmatpush.msra.mxu0 0.0
    %194 = vmatpush.msra.mxu0 0.0
    %195 = vmatpush.msra.mxu0 0.0
    %196 = vmatpush.msra.mxu0 0.0
    %197 = vmatpush.msra.mxu0 0.0
    %198 = vmatpush.msra.mxu0 0.0
    %199 = vmatpush.msra.mxu0 %v90
    %200 = vmatpush.msra.mxu0 %v88
    %201 = vmatpush.msra.mxu0 %v86
    %202 = vmatpush.msra.mxu0 %v84
    %203 = vmatmul.f32.gmra.mxu0 %v185
    %v204 = vpop.f32.mrf.mxu0
    %v205 = vadd.f32 %v182, %v204
    %206 = vdwg.mxu0
    %207 = vmatpush.msra.mxu0 0.0
    %208 = vmatpush.msra.mxu0 0.0
    %209 = vmatpush.msra.mxu0 0.0
    %210 = vmatpush.msra.mxu0 0.0
    %211 = vmatpush.msra.mxu0 0.0
    %212 = vmatpush.msra.mxu0 0.0
    %213 = vmatpush.msra.mxu0 0.0
    %214 = vmatpush.msra.mxu0 0.0
    %215 = vmatpush.msra.mxu0 0.0
    %216 = vmatpush.msra.mxu0 0.0
    %217 = vmatpush.msra.mxu0 0.0
    %218 = vmatpush.msra.mxu0 0.0
    %219 = vmatpush.msra.mxu0 %v91
    %220 = vmatpush.msra.mxu0 %v89
    %221 = vmatpush.msra.mxu0 %v87
    %222 = vmatpush.msra.mxu0 %v85
    %223 = vmatmul.f32.gmra.mxu0 %v185
    %v224 = vpop.f32.mrf.mxu0
    %v225 = vadd.f32 %v182, %v224
    %226 = vdwg.mxu0
    %v227 = vmax.f32 %v205, 0.0
    %v228 = vmax.f32 %v225, 0.0
    %229 = vrot.lane.b32.xlu0 %v227, 68
    %v230 = vpop.permute.xlu0 %229
    %231 = vrot.lane.b32.xlu0 %v228, 68
    %v232 = vpop.permute.xlu0 %231
    %v233 = vlaneseq
    %v234 = vand.u32 %v233, 127
    %vm235 = vcmp.lt.s32.totalorder %v234, 68
    %v236 = vsel %vm235, %v230, %v232
    %v237 = vsel %vm235, %v232, %v230
    %v238 = vld [vmem:[%s1] ss:$8 sm:$0x3]
    %v240 = vperm.slane %v238, 0
    %v241 = vperm.slane %v238, 1
    %v244 = vmul.f32 %v237, %v240
    %v245 = vmul.f32 %v236, %v241
    %246 = vrot.lane.b32.xlu0 %v227, 64
    %v247 = vpop.permute.xlu0 %246
    %248 = vrot.lane.b32.xlu0 %v228, 64
    %v249 = vpop.permute.xlu0 %248
    %vm250 = vcmp.lt.s32.totalorder %v234, 64
    %v251 = vsel %vm250, %v247, %v249
    %v252 = vsel %vm250, %v249, %v247
    %s253 = scalar_lea.vmem %s1, 1
    %v254 = vld [vmem:[%s253] ss:$8 sm:$0x3]
    %v256 = vperm.slane %v254, 0
    %v257 = vperm.slane %v254, 1
    %v260 = vmul.f32 %v252, %v256
    %v261 = vmul.f32 %v251, %v257
    %262 = vrot.lane.b32.xlu0 %v227, 60
    %v263 = vpop.permute.xlu0 %262
    %264 = vrot.lane.b32.xlu0 %v228, 60
    %v265 = vpop.permute.xlu0 %264
    %vm266 = vcmp.lt.s32.totalorder %v234, 60
    %v267 = vsel %vm266, %v263, %v265
    %v268 = vsel %vm266, %v265, %v263
    %s269 = scalar_lea.vmem %s1, 2
    %v270 = vld [vmem:[%s269] ss:$8 sm:$0x3]
    %v272 = vperm.slane %v270, 0
    %v273 = vperm.slane %v270, 1
    %v276 = vmul.f32 %v268, %v272
    %v277 = vmul.f32 %v267, %v273
    %278 = vrot.lane.b32.xlu0 %v227, 4
    %v279 = vpop.permute.xlu0 %278
    %280 = vrot.lane.b32.xlu0 %v228, 4
    %v281 = vpop.permute.xlu0 %280
    %vm282 = vcmp.lt.s32.totalorder %v234, 4
    %v283 = vsel %vm282, %v279, %v281
    %v284 = vsel %vm282, %v281, %v279
    %s285 = scalar_lea.vmem %s1, 3
    %v286 = vld [vmem:[%s285] ss:$8 sm:$0x3]
    %v288 = vperm.slane %v286, 0
    %v289 = vperm.slane %v286, 1
    %v292 = vmul.f32 %v284, %v288
    %v293 = vmul.f32 %v283, %v289
    %294 = vrot.lane.b32.xlu0 %v227, 124
    %v295 = vpop.permute.xlu0 %294
    %296 = vrot.lane.b32.xlu0 %v228, 124
    %v297 = vpop.permute.xlu0 %296
    %vm298 = vcmp.lt.s32.totalorder %v234, 124
    %v299 = vsel %vm298, %v295, %v297
    %v300 = vsel %vm298, %v297, %v295
    %s301 = scalar_lea.vmem %s1, 5
    %v302 = vld [vmem:[%s301] ss:$8 sm:$0x3]
    %v304 = vperm.slane %v302, 0
    %v305 = vperm.slane %v302, 1
    %v308 = vmul.f32 %v299, %v304
    %v309 = vmul.f32 %v300, %v305
    %s310 = scalar_lea.vmem %s1, 6
    %v311 = vld [vmem:[%s310] ss:$8 sm:$0x3]
    %v313 = vperm.slane %v311, 0
    %v314 = vperm.slane %v311, 1
    %v317 = vmul.f32 %v236, %v313
    %v318 = vmul.f32 %v237, %v314
    %s319 = scalar_lea.vmem %s1, 7
    %v320 = vld [vmem:[%s319] ss:$8 sm:$0x3]
    %v322 = vperm.slane %v320, 0
    %v323 = vperm.slane %v320, 1
    %v326 = vmul.f32 %v251, %v322
    %v327 = vmul.f32 %v252, %v323
    %s328 = scalar_lea.vmem %s1, 16
    %v329 = vld [vmem:[%s328] ss:$8 sm:$0x3]
    %v331 = vperm.slane %v329, 0
    %v332 = vperm.slane %v329, 1
    %v335 = vmul.f32 %v267, %v331
    %v336 = vmul.f32 %v268, %v332
    %v339 = vrot.slane %v260, 6
    %v340 = vrot.slane %v261, 6
    %v345 = vrot.slane %v276, 4
    %v346 = vrot.slane %v277, 4
    %v351 = vrot.slane %v292, 2
    %v352 = vrot.slane %v293, 2
    %v357 = vrot.slane %v308, 6
    %v358 = vrot.slane %v309, 6
    %v363 = vrot.slane %v317, 4
    %v364 = vrot.slane %v318, 4
    %v369 = vrot.slane %v326, 2
    %v370 = vrot.slane %v327, 2
    %v373 = vsel %vm146, %v244, %v339
    %v374 = vsel %vm146, %v245, %v340
    %vm375 = vcmask 1043456
    %v376 = vsel %vm375, %v373, %v345
    %v377 = vsel %vm375, %v374, %v346
    %vm378 = vcmask 1045504
    %v379 = vsel %vm378, %v376, %v351
    %v380 = vsel %vm378, %v377, %v352
    %v381 = vsel %vm146, %v227, %v357
    %v382 = vsel %vm146, %v228, %v358
    %v383 = vsel %vm375, %v381, %v363
    %v384 = vsel %vm375, %v382, %v364
    %v385 = vsel %vm378, %v383, %v369
    %v386 = vsel %vm378, %v384, %v370
    %388 = vset.pattern.permute.xlu0 0
    %389 = vperm.xlu0 %388, %v79
    %v390 = vpop.permute.xlu0 %389
    %vm392 = vcmask 146432
    %v394 = vsel %vm392, %v78, 0
    %v397 = vsel %vm146, %v335, 0
    %v400 = vsel %vm146, %v336, 0
    %402 = vmatpush.msra.mxu0 0.0
    %403 = vmatpush.msra.mxu0 0.0
    %404 = vmatpush.msra.mxu0 0.0
    %405 = vmatpush.msra.mxu0 0.0
    %406 = vmatpush.msra.mxu0 0.0
    %407 = vmatpush.msra.mxu0 0.0
    %408 = vmatpush.msra.mxu0 0.0
    %409 = vmatpush.msra.mxu0 0.0
    %410 = vmatpush.msra.mxu0 0.0
    %411 = vmatpush.msra.mxu0 0.0
    %412 = vmatpush.msra.mxu0 0.0
    %413 = vmatpush.msra.mxu0 0.0
    %414 = vmatpush.msra.mxu0 0.0
    %415 = vmatpush.msra.mxu0 %v397
    %416 = vmatpush.msra.mxu0 %v385
    %417 = vmatpush.msra.mxu0 %v379
    %418 = vmatmul.f32.gmra.mxu0 %v394
    %v419 = vpop.f32.mrf.mxu0
    %v420 = vadd.f32 %v390, %v419
    %421 = vdwg.mxu0
    %422 = vmatpush.msra.mxu0 0.0
    %423 = vmatpush.msra.mxu0 0.0
    %424 = vmatpush.msra.mxu0 0.0
    %425 = vmatpush.msra.mxu0 0.0
    %426 = vmatpush.msra.mxu0 0.0
    %427 = vmatpush.msra.mxu0 0.0
    %428 = vmatpush.msra.mxu0 0.0
    %429 = vmatpush.msra.mxu0 0.0
    %430 = vmatpush.msra.mxu0 0.0
    %431 = vmatpush.msra.mxu0 0.0
    %432 = vmatpush.msra.mxu0 0.0
    %433 = vmatpush.msra.mxu0 0.0
    %434 = vmatpush.msra.mxu0 0.0
    %435 = vmatpush.msra.mxu0 %v400
    %436 = vmatpush.msra.mxu0 %v386
    %437 = vmatpush.msra.mxu0 %v380
    %438 = vmatmul.f32.gmra.mxu0 %v394
    %v439 = vpop.f32.mrf.mxu0
    %v440 = vadd.f32 %v390, %v439
    %441 = vdwg.mxu0
    %v442 = vmax.f32 %v420, 0.0
    %v443 = vmax.f32 %v440, 0.0
    %444 = vrot.lane.b32.xlu0 %v442, 68
    %v445 = vpop.permute.xlu0 %444
    %446 = vrot.lane.b32.xlu0 %v443, 68
    %v447 = vpop.permute.xlu0 %446
    %v448 = vsel %vm235, %v445, %v447
    %v449 = vsel %vm235, %v447, %v445
    %v450 = vmul.f32 %v449, %v240
    %v451 = vmul.f32 %v448, %v241
    %452 = vrot.lane.b32.xlu0 %v442, 64
    %v453 = vpop.permute.xlu0 %452
    %454 = vrot.lane.b32.xlu0 %v443, 64
    %v455 = vpop.permute.xlu0 %454
    %v456 = vsel %vm250, %v453, %v455
    %v457 = vsel %vm250, %v455, %v453
    %v458 = vmul.f32 %v457, %v256
    %v459 = vmul.f32 %v456, %v257
    %460 = vrot.lane.b32.xlu0 %v442, 60
    %v461 = vpop.permute.xlu0 %460
    %462 = vrot.lane.b32.xlu0 %v443, 60
    %v463 = vpop.permute.xlu0 %462
    %v464 = vsel %vm266, %v461, %v463
    %v465 = vsel %vm266, %v463, %v461
    %v466 = vmul.f32 %v465, %v272
    %v467 = vmul.f32 %v464, %v273
    %468 = vrot.lane.b32.xlu0 %v442, 4
    %v469 = vpop.permute.xlu0 %468
    %470 = vrot.lane.b32.xlu0 %v443, 4
    %v471 = vpop.permute.xlu0 %470
    %v472 = vsel %vm282, %v469, %v471
    %v473 = vsel %vm282, %v471, %v469
    %v474 = vmul.f32 %v473, %v288
    %v475 = vmul.f32 %v472, %v289
    %476 = vrot.lane.b32.xlu0 %v442, 124
    %v477 = vpop.permute.xlu0 %476
    %478 = vrot.lane.b32.xlu0 %v443, 124
    %v479 = vpop.permute.xlu0 %478
    %v480 = vsel %vm298, %v477, %v479
    %v481 = vsel %vm298, %v479, %v477
    %v482 = vmul.f32 %v480, %v304
    %v483 = vmul.f32 %v481, %v305
    %v484 = vmul.f32 %v448, %v313
    %v485 = vmul.f32 %v449, %v314
    %v486 = vmul.f32 %v456, %v322
    %v487 = vmul.f32 %v457, %v323
    %v488 = vmul.f32 %v464, %v331
    %v489 = vmul.f32 %v465, %v332
    %v492 = vrot.slane %v458, 6
    %v493 = vrot.slane %v459, 6
    %v498 = vrot.slane %v466, 4
    %v499 = vrot.slane %v467, 4
    %v504 = vrot.slane %v474, 2
    %v505 = vrot.slane %v475, 2
    %v510 = vrot.slane %v482, 6
    %v511 = vrot.slane %v483, 6
    %v516 = vrot.slane %v484, 4
    %v517 = vrot.slane %v485, 4
    %v522 = vrot.slane %v486, 2
    %v523 = vrot.slane %v487, 2
    %v526 = vsel %vm146, %v450, %v492
    %v527 = vsel %vm146, %v451, %v493
    %v528 = vsel %vm375, %v526, %v498
    %v529 = vsel %vm375, %v527, %v499
    %v530 = vsel %vm378, %v528, %v504
    %v531 = vsel %vm378, %v529, %v505
    %v532 = vsel %vm146, %v442, %v510
    %v533 = vsel %vm146, %v443, %v511
    %v534 = vsel %vm375, %v532, %v516
    %v535 = vsel %vm375, %v533, %v517
    %v536 = vsel %vm378, %v534, %v522
    %v537 = vsel %vm378, %v535, %v523
    %539 = vset.pattern.permute.xlu0 0
    %540 = vperm.xlu0 %539, %v81
    %v541 = vpop.permute.xlu0 %540
    %v544 = vsel %vm392, %v80, 0
    %v547 = vsel %vm146, %v488, 0
    %v550 = vsel %vm146, %v489, 0
    %552 = vmatpush.msra.mxu0 0.0
    %553 = vmatpush.msra.mxu0 0.0
    %554 = vmatpush.msra.mxu0 0.0
    %555 = vmatpush.msra.mxu0 0.0
    %556 = vmatpush.msra.mxu0 0.0
    %557 = vmatpush.msra.mxu0 0.0
    %558 = vmatpush.msra.mxu0 0.0
    %559 = vmatpush.msra.mxu0 0.0
    %560 = vmatpush.msra.mxu0 0.0
    %561 = vmatpush.msra.mxu0 0.0
    %562 = vmatpush.msra.mxu0 0.0
    %563 = vmatpush.msra.mxu0 0.0
    %564 = vmatpush.msra.mxu0 0.0
    %565 = vmatpush.msra.mxu0 %v547
    %566 = vmatpush.msra.mxu0 %v536
    %567 = vmatpush.msra.mxu0 %v530
    %568 = vmatmul.f32.gmra.mxu0 %v544
    %v569 = vpop.f32.mrf.mxu0
    %v570 = vadd.f32 %v541, %v569
    %571 = vdwg.mxu0
    %572 = vmatpush.msra.mxu0 0.0
    %573 = vmatpush.msra.mxu0 0.0
    %574 = vmatpush.msra.mxu0 0.0
    %575 = vmatpush.msra.mxu0 0.0
    %576 = vmatpush.msra.mxu0 0.0
    %577 = vmatpush.msra.mxu0 0.0
    %578 = vmatpush.msra.mxu0 0.0
    %579 = vmatpush.msra.mxu0 0.0
    %580 = vmatpush.msra.mxu0 0.0
    %581 = vmatpush.msra.mxu0 0.0
    %582 = vmatpush.msra.mxu0 0.0
    %583 = vmatpush.msra.mxu0 0.0
    %584 = vmatpush.msra.mxu0 0.0
    %585 = vmatpush.msra.mxu0 %v550
    %586 = vmatpush.msra.mxu0 %v537
    %587 = vmatpush.msra.mxu0 %v531
    %588 = vmatmul.f32.gmra.mxu0 %v544
    %v589 = vpop.f32.mrf.mxu0
    %v590 = vadd.f32 %v541, %v589
    %591 = vdwg.mxu0
    %v592 = vmax.f32 %v570, 0.0
    %v593 = vmax.f32 %v590, 0.0
    %595 = vset.pattern.permute.xlu0 0
    %596 = vperm.xlu0 %595, %v83
    %v597 = vpop.permute.xlu0 %596
    %v599 = vperm.slane %v597, 0
    %v601 = vsel %vm133, %v82, 0
    %v604 = vsel %vm146, %v592, 0
    %v607 = vsel %vm146, %v593, 0
    %609 = vmatpush.msra.mxu0 0.0
    %610 = vmatpush.msra.mxu0 0.0
    %611 = vmatpush.msra.mxu0 0.0
    %612 = vmatpush.msra.mxu0 0.0
    %613 = vmatpush.msra.mxu0 0.0
    %614 = vmatpush.msra.mxu0 0.0
    %615 = vmatpush.msra.mxu0 0.0
    %616 = vmatpush.msra.mxu0 0.0
    %617 = vmatpush.msra.mxu0 0.0
    %618 = vmatpush.msra.mxu0 0.0
    %619 = vmatpush.msra.mxu0 0.0
    %620 = vmatpush.msra.mxu0 0.0
    %621 = vmatpush.msra.mxu0 0.0
    %622 = vmatpush.msra.mxu0 0.0
    %623 = vmatpush.msra.mxu0 0.0
    %624 = vmatpush.msra.mxu0 %v604
    %625 = vmatmul.f32.gmra.mxu0 %v601
    %v626 = vpop.f32.mrf.mxu0
    %v627 = vadd.f32 %v599, %v626
    %628 = vdwg.mxu0
    %629 = vmatpush.msra.mxu0 0.0
    %630 = vmatpush.msra.mxu0 0.0
    %631 = vmatpush.msra.mxu0 0.0
    %632 = vmatpush.msra.mxu0 0.0
    %633 = vmatpush.msra.mxu0 0.0
    %634 = vmatpush.msra.mxu0 0.0
    %635 = vmatpush.msra.mxu0 0.0
    %636 = vmatpush.msra.mxu0 0.0
    %637 = vmatpush.msra.mxu0 0.0
    %638 = vmatpush.msra.mxu0 0.0
    %639 = vmatpush.msra.mxu0 0.0
    %640 = vmatpush.msra.mxu0 0.0
    %641 = vmatpush.msra.mxu0 0.0
    %642 = vmatpush.msra.mxu0 0.0
    %643 = vmatpush.msra.mxu0 0.0
    %644 = vmatpush.msra.mxu0 %v607
    %645 = vmatmul.f32.gmra.mxu0 %v601
    %v646 = vpop.f32.mrf.mxu0
    %v647 = vadd.f32 %v599, %v646
    %648 = vdwg.mxu0
    %650 = vset.pattern.permute.xlu0 0
    %651 = vperm.xlu0 %650, %v168
    %v652 = vpop.permute.xlu0 %651
    %655 = vset.pattern.permute.xlu0 0
    %656 = vperm.xlu0 %655, %v171
    %v657 = vpop.permute.xlu0 %656
    %660 = vset.pattern.permute.xlu0 0
    %661 = vperm.xlu0 %660, %v174
    %v662 = vpop.permute.xlu0 %661
    %665 = vset.pattern.permute.xlu0 0
    %666 = vperm.xlu0 %665, %v177
    %v667 = vpop.permute.xlu0 %666
    %v669 = vperm.slane %v627, 0
    %v670 = vperm.slane %v647, 0
    %v671 = vmul.f32 %v652, %v669
    %v672 = vmul.f32 %v652, %v670
    %v673 = vmul.f32 %v657, %v669
    %v674 = vmul.f32 %v657, %v670
    %v675 = vmul.f32 %v662, %v669
    %v676 = vmul.f32 %v662, %v670
    %v677 = vmul.f32 %v667, %v669
    %v678 = vmul.f32 %v667, %v670
    %v679 = vsub.f32 0.0, %v671
    %v680 = vsub.f32 0.0, %v672
    %v681 = vsub.f32 0.0, %v673
    %v682 = vsub.f32 0.0, %v674
    %v683 = vsub.f32 0.0, %v675
    %v684 = vsub.f32 0.0, %v676
    %v685 = vsub.f32 0.0, %v677
    %v686 = vsub.f32 0.0, %v678
    %v687 = vmul.f32 %v679, 1.442695
    %v688 = vpow.pop %v687
    %v689 = vmul.f32 %v680, 1.442695
    %v690 = vpow.pop %v689
    %v691 = vmul.f32 %v681, 1.442695
    %v692 = vpow.pop %v691
    %v693 = vmul.f32 %v682, 1.442695
    %v694 = vpow.pop %v693
    %v695 = vmul.f32 %v683, 1.442695
    %v696 = vpow.pop %v695
    %v697 = vmul.f32 %v684, 1.442695
    %v698 = vpow.pop %v697
    %v699 = vmul.f32 %v685, 1.442695
    %v700 = vpow.pop %v699
    %v701 = vmul.f32 %v686, 1.442695
    %v702 = vpow.pop %v701
    %v703 = vadd.f32 %v688, 1.0
    %v704 = vadd.f32 %v690, 1.0
    %v705 = vadd.f32 %v692, 1.0
    %v706 = vadd.f32 %v694, 1.0
    %v707 = vadd.f32 %v696, 1.0
    %v708 = vadd.f32 %v698, 1.0
    %v709 = vadd.f32 %v700, 1.0
    %v710 = vadd.f32 %v702, 1.0
    %v711 = vrcp.pop %v703
    %v712 = vrcp.pop %v704
    %v713 = vrcp.pop %v705
    %v714 = vrcp.pop %v706
    %v715 = vrcp.pop %v707
    %v716 = vrcp.pop %v708
    %v717 = vrcp.pop %v709
    %v718 = vrcp.pop %v710
    %v719 = vmul.f32 %v711, %v84
    %v720 = vmul.f32 %v712, %v85
    %v721 = vmul.f32 %v713, %v86
    %v722 = vmul.f32 %v714, %v87
    %v723 = vmul.f32 %v715, %v88
    %v724 = vmul.f32 %v716, %v89
    %v725 = vmul.f32 %v717, %v90
    %v726 = vmul.f32 %v718, %v91
    %727 = vst [vmem:[#allocation6] sm:$0xff] %v719
    %728 = vst [vmem:[#allocation6 + $0x8] sm:$0xff] %v720
    %729 = vst [vmem:[#allocation6 + $0x10] sm:$0xff] %v721
    %730 = vst [vmem:[#allocation6 + $0x18] sm:$0xff] %v722
    %731 = vst [vmem:[#allocation6 + $0x20] sm:$0xff] %v723
    %732 = vst [vmem:[#allocation6 + $0x28] sm:$0xff] %v724
    %733 = vst [vmem:[#allocation6 + $0x30] sm:$0xff] %v725
    %734 = vst [vmem:[#allocation6 + $0x38] sm:$0xff] %v726
    %s735 = scalar_lea.vmem [#allocation3], 64
    %v736 = vld [vmem:[%s735] sm:$0xff]
    %v737 = vld [vmem:[%s735 + $0x8] sm:$0xff]
    %v738 = vld [vmem:[%s735 + $0x10] sm:$0xff]
    %v739 = vld [vmem:[%s735 + $0x18] sm:$0xff]
    %v740 = vld [vmem:[%s735 + $0x20] sm:$0xff]
    %v741 = vld [vmem:[%s735 + $0x28] sm:$0xff]
    %v742 = vld [vmem:[%s735 + $0x30] sm:$0xff]
    %v743 = vld [vmem:[%s735 + $0x38] sm:$0xff]
    %v744 = vadd.f32 %v736, %v737
    %745 = vadd.xlane.f32.xlu0 %v744
    %v746 = vpop.xlane.xlu0 %745
    %v747 = vadd.f32 %v738, %v739
    %748 = vadd.xlane.f32.xlu0 %v747
    %v749 = vpop.xlane.xlu0 %748
    %v750 = vadd.f32 %v740, %v741
    %751 = vadd.xlane.f32.xlu0 %v750
    %v752 = vpop.xlane.xlu0 %751
    %v753 = vadd.f32 %v742, %v743
    %754 = vadd.xlane.f32.xlu0 %v753
    %v755 = vpop.xlane.xlu0 %754
    %v756 = vmul.f32 %v746, 0.00390625
    %v757 = vmul.f32 %v749, 0.00390625
    %v758 = vmul.f32 %v752, 0.00390625
    %v759 = vmul.f32 %v755, 0.00390625
    %760 = vmatpush.msra.mxu0 0.0
    %761 = vmatpush.msra.mxu0 0.0
    %762 = vmatpush.msra.mxu0 0.0
    %763 = vmatpush.msra.mxu0 0.0
    %764 = vmatpush.msra.mxu0 0.0
    %765 = vmatpush.msra.mxu0 0.0
    %766 = vmatpush.msra.mxu0 0.0
    %767 = vmatpush.msra.mxu0 0.0
    %768 = vmatpush.msra.mxu0 0.0
    %769 = vmatpush.msra.mxu0 0.0
    %770 = vmatpush.msra.mxu0 0.0
    %771 = vmatpush.msra.mxu0 0.0
    %772 = vmatpush.msra.mxu0 %v759
    %773 = vmatpush.msra.mxu0 %v758
    %774 = vmatpush.msra.mxu0 %v757
    %775 = vmatpush.msra.mxu0 %v756
    %776 = vmatmul.f32.gmra.mxu0 %v110
    %v777 = vpop.f32.mrf.mxu0
    %v778 = vadd.f32 %v67, %v777
    %779 = vdwg.mxu0
    %v780 = vmax.f32 %v778, 0.0
    %v782 = vsel %vm146, %v780, 0
    %784 = vmatpush.msra.mxu0 0.0
    %785 = vmatpush.msra.mxu0 0.0
    %786 = vmatpush.msra.mxu0 0.0
    %787 = vmatpush.msra.mxu0 0.0
    %788 = vmatpush.msra.mxu0 0.0
    %789 = vmatpush.msra.mxu0 0.0
    %790 = vmatpush.msra.mxu0 0.0
    %791 = vmatpush.msra.mxu0 0.0
    %792 = vmatpush.msra.mxu0 0.0
    %793 = vmatpush.msra.mxu0 0.0
    %794 = vmatpush.msra.mxu0 0.0
    %795 = vmatpush.msra.mxu0 0.0
    %796 = vmatpush.msra.mxu0 0.0
    %797 = vmatpush.msra.mxu0 0.0
    %798 = vmatpush.msra.mxu0 0.0
    %799 = vmatpush.msra.mxu0 %v782
    %800 = vmatmul.f32.gmra.mxu0 %v135
    %v801 = vpop.f32.mrf.mxu0
    %v802 = vadd.f32 %v72, %v801
    %803 = vmatmul.f32.gmra.mxu0 %v138
    %v804 = vpop.f32.mrf.mxu0
    %v805 = vadd.f32 %v73, %v804
    %806 = vmatmul.f32.gmra.mxu0 %v141
    %v807 = vpop.f32.mrf.mxu0
    %v808 = vadd.f32 %v74, %v807
    %809 = vmatmul.f32.gmra.mxu0 %v144
    %v810 = vpop.f32.mrf.mxu0
    %v811 = vadd.f32 %v75, %v810
    %812 = vdwg.mxu0
    %813 = vmatpush.msra.mxu0 0.0
    %814 = vmatpush.msra.mxu0 0.0
    %815 = vmatpush.msra.mxu0 0.0
    %816 = vmatpush.msra.mxu0 0.0
    %817 = vmatpush.msra.mxu0 0.0
    %818 = vmatpush.msra.mxu0 0.0
    %819 = vmatpush.msra.mxu0 0.0
    %820 = vmatpush.msra.mxu0 0.0
    %821 = vmatpush.msra.mxu0 0.0
    %822 = vmatpush.msra.mxu0 0.0
    %823 = vmatpush.msra.mxu0 0.0
    %824 = vmatpush.msra.mxu0 0.0
    %825 = vmatpush.msra.mxu0 %v742
    %826 = vmatpush.msra.mxu0 %v740
    %827 = vmatpush.msra.mxu0 %v738
    %828 = vmatpush.msra.mxu0 %v736
    %829 = vmatmul.f32.gmra.mxu0 %v185
    %v830 = vpop.f32.mrf.mxu0
    %v831 = vadd.f32 %v182, %v830
    %832 = vdwg.mxu0
    %833 = vmatpush.msra.mxu0 0.0
    %834 = vmatpush.msra.mxu0 0.0
    %835 = vmatpush.msra.mxu0 0.0
    %836 = vmatpush.msra.mxu0 0.0
    %837 = vmatpush.msra.mxu0 0.0
    %838 = vmatpush.msra.mxu0 0.0
    %839 = vmatpush.msra.mxu0 0.0
    %840 = vmatpush.msra.mxu0 0.0
    %841 = vmatpush.msra.mxu0 0.0
    %842 = vmatpush.msra.mxu0 0.0
    %843 = vmatpush.msra.mxu0 0.0
    %844 = vmatpush.msra.mxu0 0.0
    %845 = vmatpush.msra.mxu0 %v743
    %846 = vmatpush.msra.mxu0 %v741
    %847 = vmatpush.msra.mxu0 %v739
    %848 = vmatpush.msra.mxu0 %v737
    %849 = vmatmul.f32.gmra.mxu0 %v185
    %v850 = vpop.f32.mrf.mxu0
    %v851 = vadd.f32 %v182, %v850
    %852 = vdwg.mxu0
    %v853 = vmax.f32 %v831, 0.0
    %v854 = vmax.f32 %v851, 0.0
    %855 = vrot.lane.b32.xlu0 %v853, 68
    %v856 = vpop.permute.xlu0 %855
    %857 = vrot.lane.b32.xlu0 %v854, 68
    %v858 = vpop.permute.xlu0 %857
    %v859 = vsel %vm235, %v856, %v858
    %v860 = vsel %vm235, %v858, %v856
    %v861 = vld [vmem:[%s1] ss:$8 sm:$0x3]
    %v863 = vperm.slane %v861, 0
    %v864 = vperm.slane %v861, 1
    %v867 = vmul.f32 %v860, %v863
    %v868 = vmul.f32 %v859, %v864
    %869 = vrot.lane.b32.xlu0 %v853, 64
    %v870 = vpop.permute.xlu0 %869
    %871 = vrot.lane.b32.xlu0 %v854, 64
    %v872 = vpop.permute.xlu0 %871
    %v873 = vsel %vm250, %v870, %v872
    %v874 = vsel %vm250, %v872, %v870
    %v875 = vld [vmem:[%s253] ss:$8 sm:$0x3]
    %v877 = vperm.slane %v875, 0
    %v878 = vperm.slane %v875, 1
    %v881 = vmul.f32 %v874, %v877
    %v882 = vmul.f32 %v873, %v878
    %883 = vrot.lane.b32.xlu0 %v853, 60
    %v884 = vpop.permute.xlu0 %883
    %885 = vrot.lane.b32.xlu0 %v854, 60
    %v886 = vpop.permute.xlu0 %885
    %v887 = vsel %vm266, %v884, %v886
    %v888 = vsel %vm266, %v886, %v884
    %v889 = vld [vmem:[%s269] ss:$8 sm:$0x3]
    %v891 = vperm.slane %v889, 0
    %v892 = vperm.slane %v889, 1
    %v895 = vmul.f32 %v888, %v891
    %v896 = vmul.f32 %v887, %v892
    %897 = vrot.lane.b32.xlu0 %v853, 4
    %v898 = vpop.permute.xlu0 %897
    %899 = vrot.lane.b32.xlu0 %v854, 4
    %v900 = vpop.permute.xlu0 %899
    %v901 = vsel %vm282, %v898, %v900
    %v902 = vsel %vm282, %v900, %v898
    %v903 = vld [vmem:[%s285] ss:$8 sm:$0x3]
    %v905 = vperm.slane %v903, 0
    %v906 = vperm.slane %v903, 1
    %v909 = vmul.f32 %v902, %v905
    %v910 = vmul.f32 %v901, %v906
    %911 = vrot.lane.b32.xlu0 %v853, 124
    %v912 = vpop.permute.xlu0 %911
    %913 = vrot.lane.b32.xlu0 %v854, 124
    %v914 = vpop.permute.xlu0 %913
    %v915 = vsel %vm298, %v912, %v914
    %v916 = vsel %vm298, %v914, %v912
    %v917 = vld [vmem:[%s301] ss:$8 sm:$0x3]
    %v919 = vperm.slane %v917, 0
    %v920 = vperm.slane %v917, 1
    %v923 = vmul.f32 %v915, %v919
    %v924 = vmul.f32 %v916, %v920
    %v925 = vld [vmem:[%s310] ss:$8 sm:$0x3]
    %v927 = vperm.slane %v925, 0
    %v928 = vperm.slane %v925, 1
    %v931 = vmul.f32 %v859, %v927
    %v932 = vmul.f32 %v860, %v928
    %v933 = vld [vmem:[%s319] ss:$8 sm:$0x3]
    %v935 = vperm.slane %v933, 0
    %v936 = vperm.slane %v933, 1
    %v939 = vmul.f32 %v873, %v935
    %v940 = vmul.f32 %v874, %v936
    %v941 = vld [vmem:[%s328] ss:$8 sm:$0x3]
    %v943 = vperm.slane %v941, 0
    %v944 = vperm.slane %v941, 1
    %v947 = vmul.f32 %v887, %v943
    %v948 = vmul.f32 %v888, %v944
    %v951 = vrot.slane %v881, 6
    %v952 = vrot.slane %v882, 6
    %v957 = vrot.slane %v895, 4
    %v958 = vrot.slane %v896, 4
    %v963 = vrot.slane %v909, 2
    %v964 = vrot.slane %v910, 2
    %v969 = vrot.slane %v923, 6
    %v970 = vrot.slane %v924, 6
    %v975 = vrot.slane %v931, 4
    %v976 = vrot.slane %v932, 4
    %v981 = vrot.slane %v939, 2
    %v982 = vrot.slane %v940, 2
    %v985 = vsel %vm146, %v867, %v951
    %v986 = vsel %vm146, %v868, %v952
    %v987 = vsel %vm375, %v985, %v957
    %v988 = vsel %vm375, %v986, %v958
    %v989 = vsel %vm378, %v987, %v963
    %v990 = vsel %vm378, %v988, %v964
    %v991 = vsel %vm146, %v853, %v969
    %v992 = vsel %vm146, %v854, %v970
    %v993 = vsel %vm375, %v991, %v975
    %v994 = vsel %vm375, %v992, %v976
    %v995 = vsel %vm378, %v993, %v981
    %v996 = vsel %vm378, %v994, %v982
    %v998 = vsel %vm146, %v947, 0
    %v1001 = vsel %vm146, %v948, 0
    %1003 = vmatpush.msra.mxu0 0.0
    %1004 = vmatpush.msra.mxu0 0.0
    %1005 = vmatpush.msra.mxu0 0.0
    %1006 = vmatpush.msra.mxu0 0.0
    %1007 = vmatpush.msra.mxu0 0.0
    %1008 = vmatpush.msra.mxu0 0.0
    %1009 = vmatpush.msra.mxu0 0.0
    %1010 = vmatpush.msra.mxu0 0.0
    %1011 = vmatpush.msra.mxu0 0.0
    %1012 = vmatpush.msra.mxu0 0.0
    %1013 = vmatpush.msra.mxu0 0.0
    %1014 = vmatpush.msra.mxu0 0.0
    %1015 = vmatpush.msra.mxu0 0.0
    %1016 = vmatpush.msra.mxu0 %v998
    %1017 = vmatpush.msra.mxu0 %v995
    %1018 = vmatpush.msra.mxu0 %v989
    %1019 = vmatmul.f32.gmra.mxu0 %v394
    %v1020 = vpop.f32.mrf.mxu0
    %v1021 = vadd.f32 %v390, %v1020
    %1022 = vdwg.mxu0
    %1023 = vmatpush.msra.mxu0 0.0
    %1024 = vmatpush.msra.mxu0 0.0
    %1025 = vmatpush.msra.mxu0 0.0
    %1026 = vmatpush.msra.mxu0 0.0
    %1027 = vmatpush.msra.mxu0 0.0
    %1028 = vmatpush.msra.mxu0 0.0
    %1029 = vmatpush.msra.mxu0 0.0
    %1030 = vmatpush.msra.mxu0 0.0
    %1031 = vmatpush.msra.mxu0 0.0
    %1032 = vmatpush.msra.mxu0 0.0
    %1033 = vmatpush.msra.mxu0 0.0
    %1034 = vmatpush.msra.mxu0 0.0
    %1035 = vmatpush.msra.mxu0 0.0
    %1036 = vmatpush.msra.mxu0 %v1001
    %1037 = vmatpush.msra.mxu0 %v996
    %1038 = vmatpush.msra.mxu0 %v990
    %1039 = vmatmul.f32.gmra.mxu0 %v394
    %v1040 = vpop.f32.mrf.mxu0
    %v1041 = vadd.f32 %v390, %v1040
    %1042 = vdwg.mxu0
    %v1043 = vmax.f32 %v1021, 0.0
    %v1044 = vmax.f32 %v1041, 0.0
    %1045 = vrot.lane.b32.xlu0 %v1043, 68
    %v1046 = vpop.permute.xlu0 %1045
    %1047 = vrot.lane.b32.xlu0 %v1044, 68
    %v1048 = vpop.permute.xlu0 %1047
    %v1049 = vsel %vm235, %v1046, %v1048
    %v1050 = vsel %vm235, %v1048, %v1046
    %v1051 = vmul.f32 %v1050, %v863
    %v1052 = vmul.f32 %v1049, %v864
    %1053 = vrot.lane.b32.xlu0 %v1043, 64
    %v1054 = vpop.permute.xlu0 %1053
    %1055 = vrot.lane.b32.xlu0 %v1044, 64
    %v1056 = vpop.permute.xlu0 %1055
    %v1057 = vsel %vm250, %v1054, %v1056
    %v1058 = vsel %vm250, %v1056, %v1054
    %v1059 = vmul.f32 %v1058, %v877
    %v1060 = vmul.f32 %v1057, %v878
    %1061 = vrot.lane.b32.xlu0 %v1043, 60
    %v1062 = vpop.permute.xlu0 %1061
    %1063 = vrot.lane.b32.xlu0 %v1044, 60
    %v1064 = vpop.permute.xlu0 %1063
    %v1065 = vsel %vm266, %v1062, %v1064
    %v1066 = vsel %vm266, %v1064, %v1062
    %v1067 = vmul.f32 %v1066, %v891
    %v1068 = vmul.f32 %v1065, %v892
    %1069 = vrot.lane.b32.xlu0 %v1043, 4
    %v1070 = vpop.permute.xlu0 %1069
    %1071 = vrot.lane.b32.xlu0 %v1044, 4
    %v1072 = vpop.permute.xlu0 %1071
    %v1073 = vsel %vm282, %v1070, %v1072
    %v1074 = vsel %vm282, %v1072, %v1070
    %v1075 = vmul.f32 %v1074, %v905
    %v1076 = vmul.f32 %v1073, %v906
    %1077 = vrot.lane.b32.xlu0 %v1043, 124
    %v1078 = vpop.permute.xlu0 %1077
    %1079 = vrot.lane.b32.xlu0 %v1044, 124
    %v1080 = vpop.permute.xlu0 %1079
    %v1081 = vsel %vm298, %v1078, %v1080
    %v1082 = vsel %vm298, %v1080, %v1078
    %v1083 = vmul.f32 %v1081, %v919
    %v1084 = vmul.f32 %v1082, %v920
    %v1085 = vmul.f32 %v1049, %v927
    %v1086 = vmul.f32 %v1050, %v928
    %v1087 = vmul.f32 %v1057, %v935
    %v1088 = vmul.f32 %v1058, %v936
    %v1089 = vmul.f32 %v1065, %v943
    %v1090 = vmul.f32 %v1066, %v944
    %v1093 = vrot.slane %v1059, 6
    %v1094 = vrot.slane %v1060, 6
    %v1099 = vrot.slane %v1067, 4
    %v1100 = vrot.slane %v1068, 4
    %v1105 = vrot.slane %v1075, 2
    %v1106 = vrot.slane %v1076, 2
    %v1111 = vrot.slane %v1083, 6
    %v1112 = vrot.slane %v1084, 6
    %v1117 = vrot.slane %v1085, 4
    %v1118 = vrot.slane %v1086, 4
    %v1123 = vrot.slane %v1087, 2
    %v1124 = vrot.slane %v1088, 2
    %v1127 = vsel %vm146, %v1051, %v1093
    %v1128 = vsel %vm146, %v1052, %v1094
    %v1129 = vsel %vm375, %v1127, %v1099
    %v1130 = vsel %vm375, %v1128, %v1100
    %v1131 = vsel %vm378, %v1129, %v1105
    %v1132 = vsel %vm378, %v1130, %v1106
    %v1133 = vsel %vm146, %v1043, %v1111
    %v1134 = vsel %vm146, %v1044, %v1112
    %v1135 = vsel %vm375, %v1133, %v1117
    %v1136 = vsel %vm375, %v1134, %v1118
    %v1137 = vsel %vm378, %v1135, %v1123
    %v1138 = vsel %vm378, %v1136, %v1124
    %v1140 = vsel %vm146, %v1089, 0
    %v1143 = vsel %vm146, %v1090, 0
    %1145 = vmatpush.msra.mxu0 0.0
    %1146 = vmatpush.msra.mxu0 0.0
    %1147 = vmatpush.msra.mxu0 0.0
    %1148 = vmatpush.msra.mxu0 0.0
    %1149 = vmatpush.msra.mxu0 0.0
    %1150 = vmatpush.msra.mxu0 0.0
    %1151 = vmatpush.msra.mxu0 0.0
    %1152 = vmatpush.msra.mxu0 0.0
    %1153 = vmatpush.msra.mxu0 0.0
    %1154 = vmatpush.msra.mxu0 0.0
    %1155 = vmatpush.msra.mxu0 0.0
    %1156 = vmatpush.msra.mxu0 0.0
    %1157 = vmatpush.msra.mxu0 0.0
    %1158 = vmatpush.msra.mxu0 %v1140
    %1159 = vmatpush.msra.mxu0 %v1137
    %1160 = vmatpush.msra.mxu0 %v1131
    %1161 = vmatmul.f32.gmra.mxu0 %v544
    %v1162 = vpop.f32.mrf.mxu0
    %v1163 = vadd.f32 %v541, %v1162
    %1164 = vdwg.mxu0
    %1165 = vmatpush.msra.mxu0 0.0
    %1166 = vmatpush.msra.mxu0 0.0
    %1167 = vmatpush.msra.mxu0 0.0
    %1168 = vmatpush.msra.mxu0 0.0
    %1169 = vmatpush.msra.mxu0 0.0
    %1170 = vmatpush.msra.mxu0 0.0
    %1171 = vmatpush.msra.mxu0 0.0
    %1172 = vmatpush.msra.mxu0 0.0
    %1173 = vmatpush.msra.mxu0 0.0
    %1174 = vmatpush.msra.mxu0 0.0
    %1175 = vmatpush.msra.mxu0 0.0
    %1176 = vmatpush.msra.mxu0 0.0
    %1177 = vmatpush.msra.mxu0 0.0
    %1178 = vmatpush.msra.mxu0 %v1143
    %1179 = vmatpush.msra.mxu0 %v1138
    %1180 = vmatpush.msra.mxu0 %v1132
    %1181 = vmatmul.f32.gmra.mxu0 %v544
    %v1182 = vpop.f32.mrf.mxu0
    %v1183 = vadd.f32 %v541, %v1182
    %1184 = vdwg.mxu0
    %v1185 = vmax.f32 %v1163, 0.0
    %v1186 = vmax.f32 %v1183, 0.0
    %v1188 = vsel %vm146, %v1185, 0
    %v1191 = vsel %vm146, %v1186, 0
    %1193 = vmatpush.msra.mxu0 0.0
    %1194 = vmatpush.msra.mxu0 0.0
    %1195 = vmatpush.msra.mxu0 0.0
    %1196 = vmatpush.msra.mxu0 0.0
    %1197 = vmatpush.msra.mxu0 0.0
    %1198 = vmatpush.msra.mxu0 0.0
    %1199 = vmatpush.msra.mxu0 0.0
    %1200 = vmatpush.msra.mxu0 0.0
    %1201 = vmatpush.msra.mxu0 0.0
    %1202 = vmatpush.msra.mxu0 0.0
    %1203 = vmatpush.msra.mxu0 0.0
    %1204 = vmatpush.msra.mxu0 0.0
    %1205 = vmatpush.msra.mxu0 0.0
    %1206 = vmatpush.msra.mxu0 0.0
    %1207 = vmatpush.msra.mxu0 0.0
    %1208 = vmatpush.msra.mxu0 %v1188
    %1209 = vmatmul.f32.gmra.mxu0 %v601
    %v1210 = vpop.f32.mrf.mxu0
    %v1211 = vadd.f32 %v599, %v1210
    %1212 = vdwg.mxu0
    %1213 = vmatpush.msra.mxu0 0.0
    %1214 = vmatpush.msra.mxu0 0.0
    %1215 = vmatpush.msra.mxu0 0.0
    %1216 = vmatpush.msra.mxu0 0.0
    %1217 = vmatpush.msra.mxu0 0.0
    %1218 = vmatpush.msra.mxu0 0.0
    %1219 = vmatpush.msra.mxu0 0.0
    %1220 = vmatpush.msra.mxu0 0.0
    %1221 = vmatpush.msra.mxu0 0.0
    %1222 = vmatpush.msra.mxu0 0.0
    %1223 = vmatpush.msra.mxu0 0.0
    %1224 = vmatpush.msra.mxu0 0.0
    %1225 = vmatpush.msra.mxu0 0.0
    %1226 = vmatpush.msra.mxu0 0.0
    %1227 = vmatpush.msra.mxu0 0.0
    %1228 = vmatpush.msra.mxu0 %v1191
    %1229 = vmatmul.f32.gmra.mxu0 %v601
    %v1230 = vpop.f32.mrf.mxu0
    %v1231 = vadd.f32 %v599, %v1230
    %1232 = vdwg.mxu0
    %1234 = vset.pattern.permute.xlu0 0
    %1235 = vperm.xlu0 %1234, %v802
    %v1236 = vpop.permute.xlu0 %1235
    %1239 = vset.pattern.permute.xlu0 0
    %1240 = vperm.xlu0 %1239, %v805
    %v1241 = vpop.permute.xlu0 %1240
    %1244 = vset.pattern.permute.xlu0 0
    %1245 = vperm.xlu0 %1244, %v808
    %v1246 = vpop.permute.xlu0 %1245
    %1249 = vset.pattern.permute.xlu0 0
    %1250 = vperm.xlu0 %1249, %v811
    %v1251 = vpop.permute.xlu0 %1250
    %v1253 = vperm.slane %v1211, 0
    %v1254 = vperm.slane %v1231, 0
    %v1255 = vmul.f32 %v1236, %v1253
    %v1256 = vmul.f32 %v1236, %v1254
    %v1257 = vmul.f32 %v1241, %v1253
    %v1258 = vmul.f32 %v1241, %v1254
    %v1259 = vmul.f32 %v1246, %v1253
    %v1260 = vmul.f32 %v1246, %v1254
    %v1261 = vmul.f32 %v1251, %v1253
    %v1262 = vmul.f32 %v1251, %v1254
    %v1263 = vsub.f32 0.0, %v1255
    %v1264 = vsub.f32 0.0, %v1256
    %v1265 = vsub.f32 0.0, %v1257
    %v1266 = vsub.f32 0.0, %v1258
    %v1267 = vsub.f32 0.0, %v1259
    %v1268 = vsub.f32 0.0, %v1260
    %v1269 = vsub.f32 0.0, %v1261
    %v1270 = vsub.f32 0.0, %v1262
    %v1271 = vmul.f32 %v1263, 1.442695
    %v1272 = vpow.pop %v1271
    %v1273 = vmul.f32 %v1264, 1.442695
    %v1274 = vpow.pop %v1273
    %v1275 = vmul.f32 %v1265, 1.442695
    %v1276 = vpow.pop %v1275
    %v1277 = vmul.f32 %v1266, 1.442695
    %v1278 = vpow.pop %v1277
    %v1279 = vmul.f32 %v1267, 1.442695
    %v1280 = vpow.pop %v1279
    %v1281 = vmul.f32 %v1268, 1.442695
    %v1282 = vpow.pop %v1281
    %v1283 = vmul.f32 %v1269, 1.442695
    %v1284 = vpow.pop %v1283
    %v1285 = vmul.f32 %v1270, 1.442695
    %v1286 = vpow.pop %v1285
    %v1287 = vadd.f32 %v1272, 1.0
    %v1288 = vadd.f32 %v1274, 1.0
    %v1289 = vadd.f32 %v1276, 1.0
    %v1290 = vadd.f32 %v1278, 1.0
    %v1291 = vadd.f32 %v1280, 1.0
    %v1292 = vadd.f32 %v1282, 1.0
    %v1293 = vadd.f32 %v1284, 1.0
    %v1294 = vadd.f32 %v1286, 1.0
    %v1295 = vrcp.pop %v1287
    %v1296 = vrcp.pop %v1288
    %v1297 = vrcp.pop %v1289
    %v1298 = vrcp.pop %v1290
    %v1299 = vrcp.pop %v1291
    %v1300 = vrcp.pop %v1292
    %v1301 = vrcp.pop %v1293
    %v1302 = vrcp.pop %v1294
    %v1303 = vmul.f32 %v1295, %v736
    %v1304 = vmul.f32 %v1296, %v737
    %v1305 = vmul.f32 %v1297, %v738
    %v1306 = vmul.f32 %v1298, %v739
    %v1307 = vmul.f32 %v1299, %v740
    %v1308 = vmul.f32 %v1300, %v741
    %v1309 = vmul.f32 %v1301, %v742
    %v1310 = vmul.f32 %v1302, %v743
    %s1311 = scalar_lea.vmem [#allocation6], 64
    %1312 = vst [vmem:[%s1311] sm:$0xff] %v1303
    %1313 = vst [vmem:[%s1311 + $0x8] sm:$0xff] %v1304
    %1314 = vst [vmem:[%s1311 + $0x10] sm:$0xff] %v1305
    %1315 = vst [vmem:[%s1311 + $0x18] sm:$0xff] %v1306
    %1316 = vst [vmem:[%s1311 + $0x20] sm:$0xff] %v1307
    %1317 = vst [vmem:[%s1311 + $0x28] sm:$0xff] %v1308
    %1318 = vst [vmem:[%s1311 + $0x30] sm:$0xff] %v1309
    %1319 = vst [vmem:[%s1311 + $0x38] sm:$0xff] %v1310
    // Predicated region
    $region62: #{tpu_custom_call.1} parent=1 // pred_check
      _
    $region63: #{tpu_custom_call.1} parent=1 // pred_check_branch
      %1321 = sbr.rel (0) target = $region65
    $region64: #{tpu_custom_call.1} parent=1 // pred_region
      %1323 = vsyncadd [#allocation5], 0
      %s1324 = sshll.u32 [#allocation6], 4
      %s1325 = int_to_ptr.vmem [resolvable:$true] %s1324
      %s1326 = sshll.u32 %s14, 4
      %s1327 = int_to_ptr.hbm [resolvable:$true] %s1326
      %1332 = dma.vmem_to_hbm [thread:$0]  %s1325, 2048, %s1327, [#allocation5], 256, 256, 16
    $region65: #{tpu_custom_call.1} parent=1 // pred_fallthru
      _
    // Predicated region
    $region66: #{tpu_custom_call.1} parent=1 // pred_check
      _
    $region67: #{tpu_custom_call.1} parent=1 // pred_check_branch
      %1334 = sbr.rel (0) target = $region69
    $region68: #{tpu_custom_call.1} parent=1 // pred_region
      %1336 = dma.done [#allocation5], 2048
    $region69: #{tpu_custom_call.1} parent=1 // pred_fallthru
      _
    %1337 = vsyncpa [#allocation4], 1
    %1338 = vsyncpa [#allocation5], 1

</llo_original>
